<compile_context>
chip_gen: v6e
topology: v6e:2x2x1
jax: 0.10.0
libtpu: 0.0.40
codegen_flags: <defaults>
</compile_context>

<pallas_src>
import functools

import jax
import jax.numpy as jnp
from jax.experimental import pallas as pl
from jax.experimental.pallas import tpu as pltpu


# --------------------------------------------------------------------------
# Shared MLP (column formulation: w1 (hidden, C), w2 (C, hidden) as in PyTorch)
# --------------------------------------------------------------------------
def _mlp_logits(avg, mx, w1, b1, w2, b2):
    """avg, mx: (C, 1) f32 columns -> (C, 1) logits == MLP(avg) + MLP(max)."""
    c = avg.shape[0]
    col = jax.lax.broadcasted_iota(jnp.int32, (c, 2), 1)
    pooled = jnp.where(col == 0, avg, mx)                                # (C, 2)
    h = jnp.dot(w1, pooled, preferred_element_type=jnp.float32) + b1     # (hid, 2)
    h = jnp.maximum(h, 0.0)
    out2 = jnp.dot(w2, h, preferred_element_type=jnp.float32) + b2       # (C, 2)
    # Summing the two columns adds b2 twice, matching MLP(avg) + MLP(max).
    return jnp.sum(out2, axis=1, keepdims=True)                          # (C, 1)


# --------------------------------------------------------------------------
# Single-pass fused kernel: pool + MLP + sigmoid + gate for one batch element.
# --------------------------------------------------------------------------
def _ca_fused_kernel(x_ref, w1_ref, b1_ref, w2_ref, b2_ref, o_ref):
    xb = x_ref[0]                                                        # (C, HW)
    hw = xb.shape[1]
    s = jnp.sum(xb, axis=1, keepdims=True, dtype=jnp.float32)            # (C, 1)
    avg = s * (1.0 / hw)
    mx = jnp.max(xb, axis=1, keepdims=True).astype(jnp.float32)          # (C, 1)
    logits = _mlp_logits(avg, mx, w1_ref[...], b1_ref[...],
                         w2_ref[...], b2_ref[...])
    scale = jax.nn.sigmoid(logits)                                       # (C, 1) f32
    # Gating multiply in the input dtype; lane-dense store over HW.
    o_ref[0] = (xb * scale.astype(xb.dtype)).astype(o_ref.dtype)


# --------------------------------------------------------------------------
# Two-pass (HW-tiled) kernels, for large feature maps / small VMEM (v7x).
# --------------------------------------------------------------------------
def _ca_pool_mlp_kernel(x_ref, w1_ref, b1_ref, w2_ref, b2_ref, scale_ref,
                        sum_sc, max_sc, *, hw_total, tile_hw):
    t = pl.program_id(1)
    n_t = pl.num_programs(1)

    @pl.when(t == 0)
    def _():
        sum_sc[...] = jnp.zeros_like(sum_sc)
        max_sc[...] = jnp.full_like(max_sc, -jnp.inf)

    xb = x_ref[0]                                                        # (C, tile_hw)

    def _accumulate(xs, xm):
        sum_sc[...] += jnp.sum(xs, axis=1, keepdims=True, dtype=jnp.float32)
        max_sc[...] = jnp.maximum(
            max_sc[...],
            jnp.max(xm, axis=1, keepdims=True).astype(jnp.float32))

    if hw_total % tile_hw != 0:
        # Only the ragged LAST tile pays for the iota/compare/select masking.
        @pl.when(t != n_t - 1)
        def _():
            _accumulate(xb, xb)

        @pl.when(t == n_t - 1)
        def _():
            lane = jax.lax.broadcasted_iota(jnp.int32, xb.shape, 1)
            valid = (t * tile_hw + lane) < hw_total
            _accumulate(jnp.where(valid, xb, jnp.zeros_like(xb)),
                        jnp.where(valid, xb, jnp.full_like(xb, -jnp.inf)))
    else:
        _accumulate(xb, xb)

    @pl.when(t == n_t - 1)
    def _():
        avg = sum_sc[...] * (1.0 / hw_total)
        logits = _mlp_logits(avg, max_sc[...], w1_ref[...], b1_ref[...],
                             w2_ref[...], b2_ref[...])
        scale_ref[0] = jax.nn.sigmoid(logits).astype(scale_ref.dtype)


def _ca_apply_kernel(x_ref, scale_ref, o_ref):
    xb = x_ref[0]                                                        # (C, tile_hw)
    s = scale_ref[0]                                                     # (C, 1) f32
    o_ref[0] = (xb * s.astype(xb.dtype)).astype(o_ref.dtype)


# --------------------------------------------------------------------------
# VMEM sizing helpers
# --------------------------------------------------------------------------
def _vmem_capacity_bytes():
    try:
        info = pltpu.get_tpu_info()
        cap = int(getattr(info, "vmem_capacity_bytes", 0))
        if cap > 0:
            return cap
    except Exception:
        pass
    # Fallback: derive from device_kind (v4/v5/v6 have 128 MiB/core, v7x 64 MiB).
    try:
        kind = jax.devices()[0].device_kind.lower()
        if "v7" in kind:
            return 64 * 1024 * 1024
        return 128 * 1024 * 1024
    except Exception:
        pass
    return 64 * 1024 * 1024


def _vmem_budget(cap):
    # More headroom on 128-MiB parts (v5e/v6e), conservative on v7x.
    frac = 0.8 if cap >= (100 << 20) else 0.7
    return int(cap * frac)


def _vmem_limit(bytes_needed, cap):
    return int(min(cap * 0.9, max(bytes_needed + (8 << 20), 32 << 20)))


# --------------------------------------------------------------------------
# Wrappers
# --------------------------------------------------------------------------
def _channel_attention_fused(x, w1, b1c, w2, b2c, *, vmem_limit, single_buffer):
    B, C, HW = x.shape
    hidden = w1.shape[0]
    slab_kw = dict(pipeline_mode=pl.Buffered(1)) if single_buffer else {}
    return pl.pallas_call(
        _ca_fused_kernel,
        out_shape=jax.ShapeDtypeStruct((B, C, HW), x.dtype),
        grid_spec=pltpu.PrefetchScalarGridSpec(
            num_scalar_prefetch=0,
            grid=(B,),
            in_specs=[
                pl.BlockSpec((1, C, HW), lambda b: (b, 0, 0), **slab_kw),
                pl.BlockSpec((hidden, C), lambda b: (0, 0)),
                pl.BlockSpec((hidden, 1), lambda b: (0, 0)),
                pl.BlockSpec((C, hidden), lambda b: (0, 0)),
                pl.BlockSpec((C, 1), lambda b: (0, 0)),
            ],
            out_specs=pl.BlockSpec((1, C, HW), lambda b: (b, 0, 0), **slab_kw),
        ),
        compiler_params=pltpu.CompilerParams(
            dimension_semantics=("parallel",),
            vmem_limit_bytes=int(vmem_limit),
        ),
    )(x, w1, b1c, w2, b2c)


def _run_fused_or_none(x, w1, b1c, w2, b2c, *, budget, cap):
    """Try the fused path (single-buffered first for small B); None on failure."""
    B, C, HW = x.shape
    itemsize = jnp.dtype(x.dtype).itemsize
    attempts = []
    if B <= 2:
        attempts.append((True, 2))    # Buffered(1): one in-slab + one out-slab
    attempts.append((False, 4))       # default double-buffered in + out
    for single_buffer, slabs in attempts:
        need = slabs * C * HW * itemsize + (1 << 20)
        if need > budget:
            continue
        try:
            return _channel_attention_fused(
                x, w1, b1c, w2, b2c,
                vmem_limit=_vmem_limit(need, cap),
                single_buffer=single_buffer)
        except Exception:
            continue
    return None


def _channel_attention_tiled(x, w1, b1c, w2, b2c, *, tile_hw, budget, cap):
    B, C, HW = x.shape
    hidden = w1.shape[0]
    itemsize = jnp.dtype(x.dtype).itemsize

    def pick(live_blocks):
        # Target big tiles (up to 32768 lanes ~ 4 MiB/block at C=32 f32) to
        # amortize the ~0.35 us per-grid-step overhead, bounded by VMEM budget.
        t = budget // (live_blocks * C * itemsize)
        t = min(int(t), 32768)
        t = max(128, (t // 128) * 128)
        return HW if t >= HW else t

    if tile_hw is None:
        pool_tile = pick(3)    # double-buffered x (+ slack); weights/(C,1) tiny
        apply_tile = pick(5)   # 2x in + 2x out (+ scale)
    else:
        pool_tile = apply_tile = min(int(tile_hw), HW)

    for t in (pool_tile, apply_tile):
        assert t == HW or t % 128 == 0, "tile_hw must be 128-aligned"

    n_pool = pl.cdiv(HW, pool_tile)
    n_apply = pl.cdiv(HW, apply_tile)
    pool_limit = _vmem_limit(3 * C * pool_tile * itemsize, cap)
    apply_limit = _vmem_limit(5 * C * apply_tile * itemsize, cap)

    # Pass 1: pooling + MLP + sigmoid -> per-channel scale (B, C, 1) in f32.
    pool_kernel = functools.partial(_ca_pool_mlp_kernel,
                                    hw_total=HW, tile_hw=pool_tile)
    scale = pl.pallas_call(
        pool_kernel,
        out_shape=jax.ShapeDtypeStruct((B, C, 1), jnp.float32),
        grid_spec=pltpu.PrefetchScalarGridSpec(
            num_scalar_prefetch=0,
            grid=(B, n_pool),
            in_specs=[
                pl.BlockSpec((1, C, pool_tile), lambda b, t: (b, 0, t)),
                pl.BlockSpec((hidden, C), lambda b, t: (0, 0)),
                pl.BlockSpec((hidden, 1), lambda b, t: (0, 0)),
                pl.BlockSpec((C, hidden), lambda b, t: (0, 0)),
                pl.BlockSpec((C, 1), lambda b, t: (0, 0)),
            ],
            out_specs=pl.BlockSpec((1, C, 1), lambda b, t: (b, 0, 0)),
            scratch_shapes=[pltpu.VMEM((C, 1), jnp.float32),
                            pltpu.VMEM((C, 1), jnp.float32)],
        ),
        compiler_params=pltpu.CompilerParams(
            dimension_semantics=("parallel", "arbitrary"),
            vmem_limit_bytes=pool_limit,
        ),
    )(x, w1, b1c, w2, b2c)

    # Pass 2: apply the scale; both grid axes parallel (megacore-friendly).
    out = pl.pallas_call(
        _ca_apply_kernel,
        out_shape=jax.ShapeDtypeStruct((B, C, HW), x.dtype),
        grid_spec=pltpu.PrefetchScalarGridSpec(
            num_scalar_prefetch=0,
            grid=(B, n_apply),
            in_specs=[
                pl.BlockSpec((1, C, apply_tile), lambda b, t: (b, 0, t)),
                pl.BlockSpec((1, C, 1), lambda b, t: (b, 0, 0)),
            ],
            out_specs=pl.BlockSpec((1, C, apply_tile), lambda b, t: (b, 0, t)),
        ),
        compiler_params=pltpu.CompilerParams(
            dimension_semantics=("parallel", "parallel"),
            vmem_limit_bytes=apply_limit,
        ),
    )(x, scale)
    return out


def channel_attention(x_nchw, w1, b1, w2, b2, *, force_tiled=False, tile_hw=None):
    """x_nchw: (B, C, H, W).  w1: (hidden, C), b1: (hidden,), w2: (C, hidden),
    b2: (C,)  (PyTorch nn.Linear layouts).  Returns (B, C, H, W)."""
    B, C, H, W = x_nchw.shape
    hidden = w1.shape[0]
    HW = H * W

    # Free reshapes only — no NCHW<->NHWC transposes.
    x = x_nchw.reshape(B, C, HW)
    b1c = b1.reshape(hidden, 1)
    b2c = b2.reshape(C, 1)

    cap = _vmem_capacity_bytes()
    budget = _vmem_budget(cap)

    out = None
    if not force_tiled:
        out = _run_fused_or_none(x, w1, b1c, w2, b2c, budget=budget, cap=cap)
    if out is None:
        out = _channel_attention_tiled(x, w1, b1c, w2, b2c,
                                       tile_hw=tile_hw, budget=budget, cap=cap)
    return out.reshape(B, C, H, W)


def channel_attention_ref(x, w1, b1, w2, b2):
    """Pure-JAX reference mirroring the PyTorch forward exactly (NCHW)."""
    avg = jnp.mean(x, axis=(2, 3))                      # (B, C)
    mx = jnp.max(x, axis=(2, 3))                        # (B, C)

    def mlp(v):
        h = jnp.maximum(v @ w1.T + b1, 0.0)
        return h @ w2.T + b2

    out = mlp(avg) + mlp(mx)                            # (B, C)
    scale = jax.nn.sigmoid(out)[:, :, None, None]
    return x * scale


if __name__ == "__main__":
    B, C, H, W = 2, 32, 16, 16
    reduction_ratio = 16
    hidden = C // reduction_ratio                       # 2

    key = jax.random.PRNGKey(0)
    kx, kw1, kb1, kw2, kb2 = jax.random.split(key, 5)

    x = jax.random.normal(kx, (B, C, H, W), dtype=jnp.float32)
    # Deterministic synthetic parameters (PyTorch nn.Linear shapes).
    w1 = jax.random.normal(kw1, (hidden, C), dtype=jnp.float32) * 0.1
    b1 = jax.random.normal(kb1, (hidden,), dtype=jnp.float32) * 0.1
    w2 = jax.random.normal(kw2, (C, hidden), dtype=jnp.float32) * 0.1
    b2 = jax.random.normal(kb2, (C,), dtype=jnp.float32) * 0.1

    y_ref = channel_attention_ref(x, w1, b1, w2, b2)

    # 1) Auto path (single-pass fused kernel; B<=2 so single-buffered slabs).
    y = jax.block_until_ready(channel_attention(x, w1, b1, w2, b2))
    assert y.shape == (B, C, H, W)
    assert jnp.allclose(y, y_ref, atol=2e-5, rtol=2e-5), "fused mismatch vs reference"

    # 2) Forced two-pass HW-tiled path (evenly dividing tiles).
    y_t = jax.block_until_ready(
        channel_attention(x, w1, b1, w2, b2, force_tiled=True, tile_hw=128))
    assert jnp.allclose(y_t, y_ref, atol=2e-5, rtol=2e-5), "tiled mismatch vs reference"

    # 3) Tiled path with a ragged last tile (exercises the last-tile-only mask).
    H2, W2 = 18, 18                                     # HW = 324, not 128-multiple
    x2 = jax.random.normal(kx, (B, C, H2, W2), dtype=jnp.float32)
    y2_ref = channel_attention_ref(x2, w1, b1, w2, b2)
    y2 = jax.block_until_ready(
        channel_attention(x2, w1, b1, w2, b2, force_tiled=True, tile_hw=128))
    assert jnp.allclose(y2, y2_ref, atol=2e-5, rtol=2e-5), "ragged tiled mismatch"

    print("KERNEL_OK")
</pallas_src>

<mosaic_0001>
module attributes {stable_mosaic.version = 11 : i64} {
  func.func @_ca_fused_kernel(%arg0: i32, %arg1: memref<1x32x256xf32, #tpu.memory_space<vmem>>, %arg2: memref<2x32xf32, #tpu.memory_space<vmem>>, %arg3: memref<2x1xf32, #tpu.memory_space<vmem>>, %arg4: memref<32x2xf32, #tpu.memory_space<vmem>>, %arg5: memref<32x1xf32, #tpu.memory_space<vmem>>, %arg6: memref<1x32x256xf32, #tpu.memory_space<vmem>>) attributes {dimension_semantics = [#tpu.dimension_semantics<parallel>], iteration_bounds = array<i64: 2>, scalar_prefetch = 0 : i64, scratch_operands = 0 : i64, tpu.core_type = #tpu.core_type<tc>, window_params = [{pipeline_mode = #tpu.pipeline_mode<synchronous>, transform_indices = @transform_0, window_bounds = array<i64: 1, 32, 256>}, {pipeline_mode = #tpu.pipeline_mode<synchronous>, transform_indices = @transform_1, window_bounds = array<i64: 2, 32>}, {pipeline_mode = #tpu.pipeline_mode<synchronous>, transform_indices = @transform_2, window_bounds = array<i64: 2, 1>}, {pipeline_mode = #tpu.pipeline_mode<synchronous>, transform_indices = @transform_3, window_bounds = array<i64: 32, 2>}, {pipeline_mode = #tpu.pipeline_mode<synchronous>, transform_indices = @transform_4, window_bounds = array<i64: 32, 1>}, {pipeline_mode = #tpu.pipeline_mode<synchronous>, transform_indices = @transform_5, window_bounds = array<i64: 1, 32, 256>}]} {
    %c0 = arith.constant 0 : index
    %c0_0 = arith.constant 0 : index
    %c0_1 = arith.constant 0 : index
    %0 = vector.load %arg1[%c0, %c0_0, %c0_1] : memref<1x32x256xf32, #tpu.memory_space<vmem>>, vector<1x32x256xf32>
    %1 = vector.shape_cast %0 : vector<1x32x256xf32> to vector<32x256xf32>
    %cst = arith.constant dense<0.000000e+00> : vector<32xf32>
    %2 = vector.multi_reduction <add>, %1, %cst [1] : vector<32x256xf32> to vector<32xf32>
    %3 = vector.shape_cast %2 : vector<32xf32> to vector<32x1xf32>
    %cst_2 = arith.constant 3.906250e-03 : f32
    %4 = vector.broadcast %cst_2 : f32 to vector<32x1xf32>
    %5 = arith.mulf %3, %4 : vector<32x1xf32>
    %cst_3 = arith.constant dense<0xFF800000> : vector<32xf32>
    %6 = vector.multi_reduction <maximumf>, %1, %cst_3 [1] : vector<32x256xf32> to vector<32xf32>
    %7 = vector.shape_cast %6 : vector<32xf32> to vector<32x1xf32>
    %c0_4 = arith.constant 0 : index
    %c0_5 = arith.constant 0 : index
    %8 = vector.load %arg2[%c0_4, %c0_5] : memref<2x32xf32, #tpu.memory_space<vmem>>, vector<2x32xf32>
    %c0_6 = arith.constant 0 : index
    %c0_7 = arith.constant 0 : index
    %9 = vector.load %arg3[%c0_6, %c0_7] : memref<2x1xf32, #tpu.memory_space<vmem>>, vector<2x1xf32>
    %c0_8 = arith.constant 0 : index
    %c0_9 = arith.constant 0 : index
    %10 = vector.load %arg4[%c0_8, %c0_9] : memref<32x2xf32, #tpu.memory_space<vmem>>, vector<32x2xf32>
    %c0_10 = arith.constant 0 : index
    %c0_11 = arith.constant 0 : index
    %11 = vector.load %arg5[%c0_10, %c0_11] : memref<32x1xf32, #tpu.memory_space<vmem>>, vector<32x1xf32>
    %12 = tpu.iota {dimensions = array<i32: 1>} : vector<32x2xi32>
    %c0_i32 = arith.constant 0 : i32
    %13 = vector.broadcast %c0_i32 : i32 to vector<32x2xi32>
    %14 = arith.cmpi eq, %12, %13 : vector<32x2xi32>
    %15 = vector.shape_cast %5 : vector<32x1xf32> to vector<32x1xf32>
    %16 = vector.broadcast %15 : vector<32x1xf32> to vector<32x2xf32>
    %17 = vector.shape_cast %7 : vector<32x1xf32> to vector<32x1xf32>
    %18 = vector.broadcast %17 : vector<32x1xf32> to vector<32x2xf32>
    %19 = arith.select %14, %16, %18 : vector<32x2xi1>, vector<32x2xf32>
    %cst_12 = arith.constant dense<0.000000e+00> : vector<2x2xf32>
    %20 = tpu.matmul %8, %19, %cst_12 {dimension_numbers = #tpu.dot_dimension_numbers<[1], [0], [0], [1], [0, 0, 1, 1], [], []>} : vector<2x32xf32>, vector<32x2xf32>, vector<2x2xf32> -> vector<2x2xf32>
    %21 = vector.broadcast %9 : vector<2x1xf32> to vector<2x2xf32>
    %22 = arith.addf %20, %21 : vector<2x2xf32>
    %cst_13 = arith.constant 0.000000e+00 : f32
    %23 = vector.broadcast %cst_13 : f32 to vector<2x2xf32>
    %24 = arith.maximumf %22, %23 : vector<2x2xf32>
    %cst_14 = arith.constant dense<0.000000e+00> : vector<32x2xf32>
    %25 = tpu.matmul %10, %24, %cst_14 {dimension_numbers = #tpu.dot_dimension_numbers<[1], [0], [0], [1], [0, 0, 1, 1], [], []>} : vector<32x2xf32>, vector<2x2xf32>, vector<32x2xf32> -> vector<32x2xf32>
    %26 = vector.broadcast %11 : vector<32x1xf32> to vector<32x2xf32>
    %27 = arith.addf %25, %26 : vector<32x2xf32>
    %cst_15 = arith.constant dense<0.000000e+00> : vector<32xf32>
    %28 = vector.multi_reduction <add>, %27, %cst_15 [1] : vector<32x2xf32> to vector<32xf32>
    %29 = vector.shape_cast %28 : vector<32xf32> to vector<32x1xf32>
    %30 = arith.negf %29 : vector<32x1xf32>
    %31 = math.exp %30 : vector<32x1xf32>
    %cst_16 = arith.constant 1.000000e+00 : f32
    %32 = vector.broadcast %cst_16 : f32 to vector<32x1xf32>
    %33 = arith.addf %32, %31 : vector<32x1xf32>
    %34 = arith.divf %32, %33 : vector<32x1xf32>
    %35 = vector.broadcast %34 : vector<32x1xf32> to vector<32x256xf32>
    %36 = arith.mulf %1, %35 : vector<32x256xf32>
    %c0_17 = arith.constant 0 : index
    %c0_18 = arith.constant 0 : index
    %c0_19 = arith.constant 0 : index
    %37 = vector.load %arg6[%c0_17, %c0_18, %c0_19] : memref<1x32x256xf32, #tpu.memory_space<vmem>>, vector<1x32x256xf32>
    %38 = vector.shape_cast %37 : vector<1x32x256xf32> to vector<32x256xf32>
    %39 = vector.shape_cast %36 : vector<32x256xf32> to vector<1x32x256xf32>
    tpu.vector_store %arg6[%c0_17, %c0_18, %c0_19], %39 {strides = array<i32>} : memref<1x32x256xf32, #tpu.memory_space<vmem>>, vector<1x32x256xf32>,
    return
  }
  func.func @transform_0(%arg0: i32) -> (i32, i32, i32) {
    %c0_i32 = arith.constant 0 : i32
    %c0_i32_0 = arith.constant 0 : i32
    %c0_i32_1 = arith.constant 0 : i32
    return %arg0, %c0_i32, %c0_i32_0 : i32, i32, i32
  }
  func.func @transform_1(%arg0: i32) -> (i32, i32) {
    %c0_i32 = arith.constant 0 : i32
    %c0_i32_0 = arith.constant 0 : i32
    %c0_i32_1 = arith.constant 0 : i32
    return %c0_i32, %c0_i32_0 : i32, i32
  }
  func.func @transform_2(%arg0: i32) -> (i32, i32) {
    %c0_i32 = arith.constant 0 : i32
    %c0_i32_0 = arith.constant 0 : i32
    %c0_i32_1 = arith.constant 0 : i32
    return %c0_i32, %c0_i32_0 : i32, i32
  }
  func.func @transform_3(%arg0: i32) -> (i32, i32) {
    %c0_i32 = arith.constant 0 : i32
    %c0_i32_0 = arith.constant 0 : i32
    %c0_i32_1 = arith.constant 0 : i32
    return %c0_i32, %c0_i32_0 : i32, i32
  }
  func.func @transform_4(%arg0: i32) -> (i32, i32) {
    %c0_i32 = arith.constant 0 : i32
    %c0_i32_0 = arith.constant 0 : i32
    %c0_i32_1 = arith.constant 0 : i32
    return %c0_i32, %c0_i32_0 : i32, i32
  }
  func.func @transform_5(%arg0: i32) -> (i32, i32, i32) {
    %c0_i32 = arith.constant 0 : i32
    %c0_i32_0 = arith.constant 0 : i32
    %c0_i32_1 = arith.constant 0 : i32
    return %arg0, %c0_i32, %c0_i32_0 : i32, i32, i32
  }
}

module attributes {stable_mosaic.version = 11 : i64} {
  func.func @_ca_fused_kernel(%arg0: i32, %arg1: memref<1x32x256xf32, #tpu.memory_space<vmem>>, %arg2: memref<2x32xf32, #tpu.memory_space<vmem>>, %arg3: memref<2x1xf32, #tpu.memory_space<vmem>>, %arg4: memref<32x2xf32, #tpu.memory_space<vmem>>, %arg5: memref<32x1xf32, #tpu.memory_space<vmem>>, %arg6: memref<1x32x256xf32, #tpu.memory_space<vmem>>) attributes {dimension_semantics = [#tpu.dimension_semantics<parallel>], iteration_bounds = array<i64: 2>, scalar_prefetch = 0 : i64, scratch_operands = 0 : i64, tpu.core_type = #tpu.core_type<tc>, window_params = [{transform_indices = @transform_0, window_bounds = array<i64: 1, 32, 256>}, {pipeline_mode = #tpu.pipeline_mode<synchronous>, transform_indices = @transform_1, window_bounds = array<i64: 2, 32>}, {pipeline_mode = #tpu.pipeline_mode<synchronous>, transform_indices = @transform_2, window_bounds = array<i64: 2, 1>}, {pipeline_mode = #tpu.pipeline_mode<synchronous>, transform_indices = @transform_3, window_bounds = array<i64: 32, 2>}, {pipeline_mode = #tpu.pipeline_mode<synchronous>, transform_indices = @transform_4, window_bounds = array<i64: 32, 1>}, {transform_indices = @transform_5, window_bounds = array<i64: 1, 32, 256>}]} {
    %c0 = arith.constant 0 : index
    %c0_0 = arith.constant 0 : index
    %c0_1 = arith.constant 0 : index
    %0 = vector.load %arg1[%c0, %c0_0, %c0_1] : memref<1x32x256xf32, #tpu.memory_space<vmem>>, vector<1x32x256xf32>
    %1 = vector.shape_cast %0 : vector<1x32x256xf32> to vector<32x256xf32>
    %cst = arith.constant dense<0.000000e+00> : vector<32xf32>
    %2 = vector.multi_reduction <add>, %1, %cst [1] : vector<32x256xf32> to vector<32xf32>
    %3 = vector.shape_cast %2 : vector<32xf32> to vector<32x1xf32>
    %cst_2 = arith.constant 3.906250e-03 : f32
    %4 = vector.broadcast %cst_2 : f32 to vector<32x1xf32>
    %5 = arith.mulf %3, %4 : vector<32x1xf32>
    %cst_3 = arith.constant dense<0xFF800000> : vector<32xf32>
    %6 = vector.multi_reduction <maximumf>, %1, %cst_3 [1] : vector<32x256xf32> to vector<32xf32>
    %7 = vector.shape_cast %6 : vector<32xf32> to vector<32x1xf32>
    %c0_4 = arith.constant 0 : index
    %c0_5 = arith.constant 0 : index
    %8 = vector.load %arg2[%c0_4, %c0_5] : memref<2x32xf32, #tpu.memory_space<vmem>>, vector<2x32xf32>
    %c0_6 = arith.constant 0 : index
    %c0_7 = arith.constant 0 : index
    %9 = vector.load %arg3[%c0_6, %c0_7] : memref<2x1xf32, #tpu.memory_space<vmem>>, vector<2x1xf32>
    %c0_8 = arith.constant 0 : index
    %c0_9 = arith.constant 0 : index
    %10 = vector.load %arg4[%c0_8, %c0_9] : memref<32x2xf32, #tpu.memory_space<vmem>>, vector<32x2xf32>
    %c0_10 = arith.constant 0 : index
    %c0_11 = arith.constant 0 : index
    %11 = vector.load %arg5[%c0_10, %c0_11] : memref<32x1xf32, #tpu.memory_space<vmem>>, vector<32x1xf32>
    %12 = tpu.iota {dimensions = array<i32: 1>} : vector<32x2xi32>
    %c0_i32 = arith.constant 0 : i32
    %13 = vector.broadcast %c0_i32 : i32 to vector<32x2xi32>
    %14 = arith.cmpi eq, %12, %13 : vector<32x2xi32>
    %15 = vector.shape_cast %5 : vector<32x1xf32> to vector<32x1xf32>
    %16 = vector.broadcast %15 : vector<32x1xf32> to vector<32x2xf32>
    %17 = vector.shape_cast %7 : vector<32x1xf32> to vector<32x1xf32>
    %18 = vector.broadcast %17 : vector<32x1xf32> to vector<32x2xf32>
    %19 = arith.select %14, %16, %18 : vector<32x2xi1>, vector<32x2xf32>
    %cst_12 = arith.constant dense<0.000000e+00> : vector<2x2xf32>
    %20 = tpu.matmul %8, %19, %cst_12 {dimension_numbers = #tpu.dot_dimension_numbers<[1], [0], [0], [1], [0, 0, 1, 1], [], []>} : vector<2x32xf32>, vector<32x2xf32>, vector<2x2xf32> -> vector<2x2xf32>
    %21 = vector.broadcast %9 : vector<2x1xf32> to vector<2x2xf32>
    %22 = arith.addf %20, %21 : vector<2x2xf32>
    %cst_13 = arith.constant 0.000000e+00 : f32
    %23 = vector.broadcast %cst_13 : f32 to vector<2x2xf32>
    %24 = arith.maximumf %22, %23 : vector<2x2xf32>
    %cst_14 = arith.constant dense<0.000000e+00> : vector<32x2xf32>
    %25 = tpu.matmul %10, %24, %cst_14 {dimension_numbers = #tpu.dot_dimension_numbers<[1], [0], [0], [1], [0, 0, 1, 1], [], []>} : vector<32x2xf32>, vector<2x2xf32>, vector<32x2xf32> -> vector<32x2xf32>
    %26 = vector.broadcast %11 : vector<32x1xf32> to vector<32x2xf32>
    %27 = arith.addf %25, %26 : vector<32x2xf32>
    %cst_15 = arith.constant dense<0.000000e+00> : vector<32xf32>
    %28 = vector.multi_reduction <add>, %27, %cst_15 [1] : vector<32x2xf32> to vector<32xf32>
    %29 = vector.shape_cast %28 : vector<32xf32> to vector<32x1xf32>
    %30 = arith.negf %29 : vector<32x1xf32>
    %31 = math.exp %30 : vector<32x1xf32>
    %cst_16 = arith.constant 1.000000e+00 : f32
    %32 = vector.broadcast %cst_16 : f32 to vector<32x1xf32>
    %33 = arith.addf %32, %31 : vector<32x1xf32>
    %34 = arith.divf %32, %33 : vector<32x1xf32>
    %35 = vector.broadcast %34 : vector<32x1xf32> to vector<32x256xf32>
    %36 = arith.mulf %1, %35 : vector<32x256xf32>
    %c0_17 = arith.constant 0 : index
    %c0_18 = arith.constant 0 : index
    %c0_19 = arith.constant 0 : index
    %37 = vector.load %arg6[%c0_17, %c0_18, %c0_19] : memref<1x32x256xf32, #tpu.memory_space<vmem>>, vector<1x32x256xf32>
    %38 = vector.shape_cast %37 : vector<1x32x256xf32> to vector<32x256xf32>
    %39 = vector.shape_cast %36 : vector<32x256xf32> to vector<1x32x256xf32>
    tpu.vector_store %arg6[%c0_17, %c0_18, %c0_19], %39 {strides = array<i32>} : memref<1x32x256xf32, #tpu.memory_space<vmem>>, vector<1x32x256xf32>,
    return
  }
  func.func @transform_0(%arg0: i32) -> (i32, i32, i32) {
    %c0_i32 = arith.constant 0 : i32
    %c0_i32_0 = arith.constant 0 : i32
    %c0_i32_1 = arith.constant 0 : i32
    return %arg0, %c0_i32, %c0_i32_0 : i32, i32, i32
  }
  func.func @transform_1(%arg0: i32) -> (i32, i32) {
    %c0_i32 = arith.constant 0 : i32
    %c0_i32_0 = arith.constant 0 : i32
    %c0_i32_1 = arith.constant 0 : i32
    return %c0_i32, %c0_i32_0 : i32, i32
  }
  func.func @transform_2(%arg0: i32) -> (i32, i32) {
    %c0_i32 = arith.constant 0 : i32
    %c0_i32_0 = arith.constant 0 : i32
    %c0_i32_1 = arith.constant 0 : i32
    return %c0_i32, %c0_i32_0 : i32, i32
  }
  func.func @transform_3(%arg0: i32) -> (i32, i32) {
    %c0_i32 = arith.constant 0 : i32
    %c0_i32_0 = arith.constant 0 : i32
    %c0_i32_1 = arith.constant 0 : i32
    return %c0_i32, %c0_i32_0 : i32, i32
  }
  func.func @transform_4(%arg0: i32) -> (i32, i32) {
    %c0_i32 = arith.constant 0 : i32
    %c0_i32_0 = arith.constant 0 : i32
    %c0_i32_1 = arith.constant 0 : i32
    return %c0_i32, %c0_i32_0 : i32, i32
  }
  func.func @transform_5(%arg0: i32) -> (i32, i32, i32) {
    %c0_i32 = arith.constant 0 : i32
    %c0_i32_0 = arith.constant 0 : i32
    %c0_i32_1 = arith.constant 0 : i32
    return %arg0, %c0_i32, %c0_i32_0 : i32, i32, i32
  }
}

module attributes {stable_mosaic.version = 11 : i64} {
  func.func @_ca_pool_mlp_kernel(%arg0: i32, %arg1: i32, %arg2: memref<1x32x256xf32, #tpu.memory_space<vmem>>, %arg3: memref<2x32xf32, #tpu.memory_space<vmem>>, %arg4: memref<2x1xf32, #tpu.memory_space<vmem>>, %arg5: memref<32x2xf32, #tpu.memory_space<vmem>>, %arg6: memref<32x1xf32, #tpu.memory_space<vmem>>, %arg7: memref<1x32x1xf32, #tpu.memory_space<vmem>>, %arg8: memref<32x1xf32, #tpu.memory_space<vmem>>, %arg9: memref<32x1xf32, #tpu.memory_space<vmem>>) attributes {dimension_semantics = [#tpu.dimension_semantics<parallel>, #tpu.dimension_semantics<arbitrary>], iteration_bounds = array<i64: 2, 1>, scalar_prefetch = 0 : i64, scratch_operands = 2 : i64, tpu.core_type = #tpu.core_type<tc>, window_params = [{transform_indices = @transform_0, window_bounds = array<i64: 1, 32, 256>}, {pipeline_mode = #tpu.pipeline_mode<synchronous>, transform_indices = @transform_1, window_bounds = array<i64: 2, 32>}, {pipeline_mode = #tpu.pipeline_mode<synchronous>, transform_indices = @transform_2, window_bounds = array<i64: 2, 1>}, {pipeline_mode = #tpu.pipeline_mode<synchronous>, transform_indices = @transform_3, window_bounds = array<i64: 32, 2>}, {pipeline_mode = #tpu.pipeline_mode<synchronous>, transform_indices = @transform_4, window_bounds = array<i64: 32, 1>}, {transform_indices = @transform_5, window_bounds = array<i64: 1, 32, 1>}]} {
    %c0_i32 = arith.constant 0 : i32
    %0 = arith.cmpi eq, %arg1, %c0_i32 : i32
    %1 = arith.extui %0 : i1 to i32
    %c0_i32_0 = arith.constant 0 : i32
    %2 = arith.cmpi ne, %1, %c0_i32_0 : i32
    scf.if %2 {
      %cst_14 = arith.constant 0.000000e+00 : f32
      %18 = vector.broadcast %cst_14 : f32 to vector<32x1xf32>
      %c0_15 = arith.constant 0 : index
      %c0_16 = arith.constant 0 : index
      %19 = vector.load %arg8[%c0_15, %c0_16] : memref<32x1xf32, #tpu.memory_space<vmem>>, vector<32x1xf32>
      tpu.vector_store %arg8[%c0_15, %c0_16], %18 {strides = array<i32>} : memref<32x1xf32, #tpu.memory_space<vmem>>, vector<32x1xf32>,
      %cst_17 = arith.constant 0xFF800000 : f32
      %20 = vector.broadcast %cst_17 : f32 to vector<32x1xf32>
      %c0_18 = arith.constant 0 : index
      %c0_19 = arith.constant 0 : index
      %21 = vector.load %arg9[%c0_18, %c0_19] : memref<32x1xf32, #tpu.memory_space<vmem>>, vector<32x1xf32>
      tpu.vector_store %arg9[%c0_18, %c0_19], %20 {strides = array<i32>} : memref<32x1xf32, #tpu.memory_space<vmem>>, vector<32x1xf32>,
    } else {
    }
    %c0 = arith.constant 0 : index
    %c0_1 = arith.constant 0 : index
    %c0_2 = arith.constant 0 : index
    %3 = vector.load %arg2[%c0, %c0_1, %c0_2] : memref<1x32x256xf32, #tpu.memory_space<vmem>>, vector<1x32x256xf32>
    %4 = vector.shape_cast %3 : vector<1x32x256xf32> to vector<32x256xf32>
    %c0_3 = arith.constant 0 : index
    %c0_4 = arith.constant 0 : index
    %5 = vector.load %arg8[%c0_3, %c0_4] : memref<32x1xf32, #tpu.memory_space<vmem>>, vector<32x1xf32>
    %cst = arith.constant dense<0.000000e+00> : vector<32xf32>
    %6 = vector.multi_reduction <add>, %4, %cst [1] : vector<32x256xf32> to vector<32xf32>
    %7 = vector.shape_cast %6 : vector<32xf32> to vector<32x1xf32>
    %8 = arith.addf %5, %7 : vector<32x1xf32>
    %c0_5 = arith.constant 0 : index
    %c0_6 = arith.constant 0 : index
    %9 = vector.load %arg8[%c0_5, %c0_6] : memref<32x1xf32, #tpu.memory_space<vmem>>, vector<32x1xf32>
    tpu.vector_store %arg8[%c0_5, %c0_6], %8 {strides = array<i32>} : memref<32x1xf32, #tpu.memory_space<vmem>>, vector<32x1xf32>,
    %c0_7 = arith.constant 0 : index
    %c0_8 = arith.constant 0 : index
    %10 = vector.load %arg9[%c0_7, %c0_8] : memref<32x1xf32, #tpu.memory_space<vmem>>, vector<32x1xf32>
    %cst_9 = arith.constant dense<0xFF800000> : vector<32xf32>
    %11 = vector.multi_reduction <maximumf>, %4, %cst_9 [1] : vector<32x256xf32> to vector<32xf32>
    %12 = vector.shape_cast %11 : vector<32xf32> to vector<32x1xf32>
    %13 = arith.maximumf %10, %12 : vector<32x1xf32>
    %c0_10 = arith.constant 0 : index
    %c0_11 = arith.constant 0 : index
    %14 = vector.load %arg9[%c0_10, %c0_11] : memref<32x1xf32, #tpu.memory_space<vmem>>, vector<32x1xf32>
    tpu.vector_store %arg9[%c0_10, %c0_11], %13 {strides = array<i32>} : memref<32x1xf32, #tpu.memory_space<vmem>>, vector<32x1xf32>,
    %c0_i32_12 = arith.constant 0 : i32
    %15 = arith.cmpi eq, %arg1, %c0_i32_12 : i32
    %16 = arith.extui %15 : i1 to i32
    %c0_i32_13 = arith.constant 0 : i32
    %17 = arith.cmpi ne, %16, %c0_i32_13 : i32
    scf.if %17 {
      %c0_14 = arith.constant 0 : index
      %c0_15 = arith.constant 0 : index
      %18 = vector.load %arg8[%c0_14, %c0_15] : memref<32x1xf32, #tpu.memory_space<vmem>>, vector<32x1xf32>
      %cst_16 = arith.constant 3.906250e-03 : f32
      %19 = vector.broadcast %cst_16 : f32 to vector<32x1xf32>
      %20 = arith.mulf %18, %19 : vector<32x1xf32>
      %c0_17 = arith.constant 0 : index
      %c0_18 = arith.constant 0 : index
      %21 = vector.load %arg9[%c0_17, %c0_18] : memref<32x1xf32, #tpu.memory_space<vmem>>, vector<32x1xf32>
      %c0_19 = arith.constant 0 : index
      %c0_20 = arith.constant 0 : index
      %22 = vector.load %arg3[%c0_19, %c0_20] : memref<2x32xf32, #tpu.memory_space<vmem>>, vector<2x32xf32>
      %c0_21 = arith.constant 0 : index
      %c0_22 = arith.constant 0 : index
      %23 = vector.load %arg4[%c0_21, %c0_22] : memref<2x1xf32, #tpu.memory_space<vmem>>, vector<2x1xf32>
      %c0_23 = arith.constant 0 : index
      %c0_24 = arith.constant 0 : index
      %24 = vector.load %arg5[%c0_23, %c0_24] : memref<32x2xf32, #tpu.memory_space<vmem>>, vector<32x2xf32>
      %c0_25 = arith.constant 0 : index
      %c0_26 = arith.constant 0 : index
      %25 = vector.load %arg6[%c0_25, %c0_26] : memref<32x1xf32, #tpu.memory_space<vmem>>, vector<32x1xf32>
      %26 = tpu.iota {dimensions = array<i32: 1>} : vector<32x2xi32>
      %c0_i32_27 = arith.constant 0 : i32
      %27 = vector.broadcast %c0_i32_27 : i32 to vector<32x2xi32>
      %28 = arith.cmpi eq, %26, %27 : vector<32x2xi32>
      %29 = vector.shape_cast %20 : vector<32x1xf32> to vector<32x1xf32>
      %30 = vector.broadcast %29 : vector<32x1xf32> to vector<32x2xf32>
      %31 = vector.shape_cast %21 : vector<32x1xf32> to vector<32x1xf32>
      %32 = vector.broadcast %31 : vector<32x1xf32> to vector<32x2xf32>
      %33 = arith.select %28, %30, %32 : vector<32x2xi1>, vector<32x2xf32>
      %cst_28 = arith.constant dense<0.000000e+00> : vector<2x2xf32>
      %34 = tpu.matmul %22, %33, %cst_28 {dimension_numbers = #tpu.dot_dimension_numbers<[1], [0], [0], [1], [0, 0, 1, 1], [], []>} : vector<2x32xf32>, vector<32x2xf32>, vector<2x2xf32> -> vector<2x2xf32>
      %35 = vector.broadcast %23 : vector<2x1xf32> to vector<2x2xf32>
      %36 = arith.addf %34, %35 : vector<2x2xf32>
      %cst_29 = arith.constant 0.000000e+00 : f32
      %37 = vector.broadcast %cst_29 : f32 to vector<2x2xf32>
      %38 = arith.maximumf %36, %37 : vector<2x2xf32>
      %cst_30 = arith.constant dense<0.000000e+00> : vector<32x2xf32>
      %39 = tpu.matmul %24, %38, %cst_30 {dimension_numbers = #tpu.dot_dimension_numbers<[1], [0], [0], [1], [0, 0, 1, 1], [], []>} : vector<32x2xf32>, vector<2x2xf32>, vector<32x2xf32> -> vector<32x2xf32>
      %40 = vector.broadcast %25 : vector<32x1xf32> to vector<32x2xf32>
      %41 = arith.addf %39, %40 : vector<32x2xf32>
      %cst_31 = arith.constant dense<0.000000e+00> : vector<32xf32>
      %42 = vector.multi_reduction <add>, %41, %cst_31 [1] : vector<32x2xf32> to vector<32xf32>
      %43 = vector.shape_cast %42 : vector<32xf32> to vector<32x1xf32>
      %44 = arith.negf %43 : vector<32x1xf32>
      %45 = math.exp %44 : vector<32x1xf32>
      %cst_32 = arith.constant 1.000000e+00 : f32
      %46 = vector.broadcast %cst_32 : f32 to vector<32x1xf32>
      %47 = arith.addf %46, %45 : vector<32x1xf32>
      %48 = arith.divf %46, %47 : vector<32x1xf32>
      %c0_33 = arith.constant 0 : index
      %c0_34 = arith.constant 0 : index
      %c0_35 = arith.constant 0 : index
      %49 = vector.load %arg7[%c0_33, %c0_34, %c0_35] : memref<1x32x1xf32, #tpu.memory_space<vmem>>, vector<1x32x1xf32>
      %50 = vector.shape_cast %49 : vector<1x32x1xf32> to vector<32x1xf32>
      %51 = vector.shape_cast %48 : vector<32x1xf32> to vector<1x32x1xf32>
      tpu.vector_store %arg7[%c0_33, %c0_34, %c0_35], %51 {strides = array<i32>} : memref<1x32x1xf32, #tpu.memory_space<vmem>>, vector<1x32x1xf32>,
    } else {
    }
    return
  }
  func.func @transform_0(%arg0: i32, %arg1: i32) -> (i32, i32, i32) {
    %c0_i32 = arith.constant 0 : i32
    %c0_i32_0 = arith.constant 0 : i32
    return %arg0, %c0_i32, %arg1 : i32, i32, i32
  }
  func.func @transform_1(%arg0: i32, %arg1: i32) -> (i32, i32) {
    %c0_i32 = arith.constant 0 : i32
    %c0_i32_0 = arith.constant 0 : i32
    %c0_i32_1 = arith.constant 0 : i32
    return %c0_i32, %c0_i32_0 : i32, i32
  }
  func.func @transform_2(%arg0: i32, %arg1: i32) -> (i32, i32) {
    %c0_i32 = arith.constant 0 : i32
    %c0_i32_0 = arith.constant 0 : i32
    %c0_i32_1 = arith.constant 0 : i32
    return %c0_i32, %c0_i32_0 : i32, i32
  }
  func.func @transform_3(%arg0: i32, %arg1: i32) -> (i32, i32) {
    %c0_i32 = arith.constant 0 : i32
    %c0_i32_0 = arith.constant 0 : i32
    %c0_i32_1 = arith.constant 0 : i32
    return %c0_i32, %c0_i32_0 : i32, i32
  }
  func.func @transform_4(%arg0: i32, %arg1: i32) -> (i32, i32) {
    %c0_i32 = arith.constant 0 : i32
    %c0_i32_0 = arith.constant 0 : i32
    %c0_i32_1 = arith.constant 0 : i32
    return %c0_i32, %c0_i32_0 : i32, i32
  }
  func.func @transform_5(%arg0: i32, %arg1: i32) -> (i32, i32, i32) {
    %c0_i32 = arith.constant 0 : i32
    %c0_i32_0 = arith.constant 0 : i32
    %c0_i32_1 = arith.constant 0 : i32
    return %arg0, %c0_i32, %c0_i32_0 : i32, i32, i32
  }
}

</mosaic_0001>

<llo_original>
// kernel: tpu_custom_call.1
$region0: #{tpu_custom_call.1}
  #allocation0 [shape = 'u32[]', space=smem, size = 0x4, offset = 0x4, fixed_abs, tag = 'smem constant byte address 0x4 - core index']
  #allocation1 [shape = 'u32[144,128]{1,0:T(1,128)}', space=vmem, size = 0x12000, scoped, tag = 'internal scratch']
  %s0 = inlined_call_operand.hbm [shape: f32[2,32,256], index: 0, kind: input, shape index: {}]
  %s1 = inlined_call_operand.vmem [shape: f32[2,32], index: 1, kind: input, shape index: {}]
  %s2 = inlined_call_operand.vmem [shape: f32[2,1], index: 2, kind: input, shape index: {}]
  %s3 = inlined_call_operand.vmem [shape: f32[32,2], index: 3, kind: input, shape index: {}]
  %s4 = inlined_call_operand.vmem [shape: f32[32,1], index: 4, kind: input, shape index: {}]
  %s5 = inlined_call_operand.hbm [shape: f32[2,32,256], index: 5, kind: output, shape index: {}]
  %s6 = sld [smem:[#allocation0]]
  $region57: #{tpu_custom_call.1} parent=0
    _
  %s8 = ssub.s32 1, %s6
  %s9 = scalar_select 0, %s8, %s6
  $region1: #{tpu_custom_call.1} parent=0
    #allocation2 [shape = 'u8[32768]{0}', space=vmem, size = 0x8000, scoped, tag = 'input window, operand 0, single buffered']
    #allocation3 [shape = 's32[2]{0}', space=sflag, size = 0x8, scoped, tag = 'scoped memory for tpu_custom_call.1']
    #allocation4 [shape = 's32[2]{0}', space=sflag, size = 0x8, scoped, tag = 'scoped memory for tpu_custom_call.1']
    #allocation5 [shape = 'u8[32768]{0}', space=vmem, size = 0x8000, scoped, tag = 'output window, operand 0, single buffered']
    %10 = vsyncpa [#allocation3], 0
    %11 = vsyncpa [#allocation4], 0
    loop: start=0, step=1, limit=4
    $region2: #{tpu_custom_call.1} parent=1 // loop_pre_header
      _
    $region3: #{tpu_custom_call.1} parent=1 // loop_header
      %s13 = sphi 0, %s17
      %p14 = scmp.ge.s32.totalorder %s13, 4
      %s23 = sphi 0, %s25
      %s26 = sphi 0, %s23
      %s27 = sphi 0, %s26
      %s43 = sphi 0, %s27
      %s47 = sphi 0, %s47
      %s49 = sphi 0, %s47
      %s50 = sphi 0, %s49
      %s64 = sphi 0, %s50
      %s68 = sphi 0, %s68
      %s70 = sphi 0, %s68
      %s71 = sphi 0, %s70
      %s85 = sphi 0, %s71
      %s89 = sphi 0, %s89
      %s91 = sphi 0, %s89
      %s92 = sphi 0, %s91
      %s106 = sphi 0, %s92
      %s110 = sphi 0, %s110
      %s112 = sphi 0, %s110
      %s113 = sphi 0, %s112
      %s127 = sphi 0, %s113
      %s133 = sphi 0, %s135
      %s136 = sphi 0, %s133
      %s137 = sphi 0, %s136
      %s153 = sphi 0, %s137
    $region4: #{tpu_custom_call.1} parent=1 // loop_header_branch
      %16 = sbr.rel (%p14) target = $region8
    $region5: #{tpu_custom_call.1} parent=1 // loop_body
      %s18 = ssub.s32 %s13, 1
      %s19 = ssub.s32 %s13, 2
      %s20 = sadd.s32 %s13, 1
      %s21 = ssub.s32 %s13, %s20
      %p22 = scmp.eq.s32.totalorder %s21, 0
      %s24 = sadd.s32 %s23, 1
      %s25 = scalar_select %p22, %s23, %s24
      %p28 = pneg %p22
      %p29 = scmp.eq.s32.totalorder %s13, 1
      %p30 = por %p28, %p29
      %p31 = scmp.ne.s32.totalorder %s23, %s26
      %p32 = scmp.eq.s32.totalorder %s13, 0
      %p33 = por %p31, %p32
      %p34 = scmp.ne.s32.totalorder %s23, %s26
      %p35 = scmp.eq.s32.totalorder %s18, 1
      %p36 = por %p34, %p35
      %p37 = scmp.ne.s32.totalorder %s26, %s27
      %p38 = scmp.eq.s32.totalorder %s18, 0
      %p39 = por %p37, %p38
      %p40 = scmp.ne.s32.totalorder %s26, %s27
      %p41 = scmp.eq.s32.totalorder %s19, 1
      %p42 = por %p40, %p41
      %p44 = scmp.ne.s32.totalorder %s27, %s43
      %p45 = scmp.eq.s32.totalorder %s19, 0
      %p46 = por %p44, %p45
      %s48 = sadd.s32 %s47, 1
      %p51 = scmp.eq.s32.totalorder %s13, 1
      %p52 = scmp.ne.s32.totalorder %s47, %s49
      %p53 = scmp.eq.s32.totalorder %s13, 0
      %p54 = por %p52, %p53
      %p55 = scmp.ne.s32.totalorder %s47, %s49
      %p56 = scmp.eq.s32.totalorder %s18, 1
      %p57 = por %p55, %p56
      %p58 = scmp.ne.s32.totalorder %s49, %s50
      %p59 = scmp.eq.s32.totalorder %s18, 0
      %p60 = por %p58, %p59
      %p61 = scmp.ne.s32.totalorder %s49, %s50
      %p62 = scmp.eq.s32.totalorder %s19, 1
      %p63 = por %p61, %p62
      %p65 = scmp.ne.s32.totalorder %s50, %s64
      %p66 = scmp.eq.s32.totalorder %s19, 0
      %p67 = por %p65, %p66
      %s69 = sadd.s32 %s68, 1
      %p72 = scmp.eq.s32.totalorder %s13, 1
      %p73 = scmp.ne.s32.totalorder %s68, %s70
      %p74 = scmp.eq.s32.totalorder %s13, 0
      %p75 = por %p73, %p74
      %p76 = scmp.ne.s32.totalorder %s68, %s70
      %p77 = scmp.eq.s32.totalorder %s18, 1
      %p78 = por %p76, %p77
      %p79 = scmp.ne.s32.totalorder %s70, %s71
      %p80 = scmp.eq.s32.totalorder %s18, 0
      %p81 = por %p79, %p80
      %p82 = scmp.ne.s32.totalorder %s70, %s71
      %p83 = scmp.eq.s32.totalorder %s19, 1
      %p84 = por %p82, %p83
      %p86 = scmp.ne.s32.totalorder %s71, %s85
      %p87 = scmp.eq.s32.totalorder %s19, 0
      %p88 = por %p86, %p87
      %s90 = sadd.s32 %s89, 1
      %p93 = scmp.eq.s32.totalorder %s13, 1
      %p94 = scmp.ne.s32.totalorder %s89, %s91
      %p95 = scmp.eq.s32.totalorder %s13, 0
      %p96 = por %p94, %p95
      %p97 = scmp.ne.s32.totalorder %s89, %s91
      %p98 = scmp.eq.s32.totalorder %s18, 1
      %p99 = por %p97, %p98
      %p100 = scmp.ne.s32.totalorder %s91, %s92
      %p101 = scmp.eq.s32.totalorder %s18, 0
      %p102 = por %p100, %p101
      %p103 = scmp.ne.s32.totalorder %s91, %s92
      %p104 = scmp.eq.s32.totalorder %s19, 1
      %p105 = por %p103, %p104
      %p107 = scmp.ne.s32.totalorder %s92, %s106
      %p108 = scmp.eq.s32.totalorder %s19, 0
      %p109 = por %p107, %p108
      %s111 = sadd.s32 %s110, 1
      %p114 = scmp.eq.s32.totalorder %s13, 1
      %p115 = scmp.ne.s32.totalorder %s110, %s112
      %p116 = scmp.eq.s32.totalorder %s13, 0
      %p117 = por %p115, %p116
      %p118 = scmp.ne.s32.totalorder %s110, %s112
      %p119 = scmp.eq.s32.totalorder %s18, 1
      %p120 = por %p118, %p119
      %p121 = scmp.ne.s32.totalorder %s112, %s113
      %p122 = scmp.eq.s32.totalorder %s18, 0
      %p123 = por %p121, %p122
      %p124 = scmp.ne.s32.totalorder %s112, %s113
      %p125 = scmp.eq.s32.totalorder %s19, 1
      %p126 = por %p124, %p125
      %p128 = scmp.ne.s32.totalorder %s113, %s127
      %p129 = scmp.eq.s32.totalorder %s19, 0
      %p130 = por %p128, %p129
      %s131 = ssub.s32 %s13, %s20
      %p132 = scmp.eq.s32.totalorder %s131, 0
      %s134 = sadd.s32 %s133, 1
      %s135 = scalar_select %p132, %s133, %s134
      %p138 = pneg %p132
      %p139 = scmp.eq.s32.totalorder %s13, 1
      %p140 = por %p138, %p139
      %p141 = scmp.ne.s32.totalorder %s133, %s136
      %p142 = scmp.eq.s32.totalorder %s13, 0
      %p143 = por %p141, %p142
      %p144 = scmp.ne.s32.totalorder %s133, %s136
      %p145 = scmp.eq.s32.totalorder %s18, 1
      %p146 = por %p144, %p145
      %p147 = scmp.ne.s32.totalorder %s136, %s137
      %p148 = scmp.eq.s32.totalorder %s18, 0
      %p149 = por %p147, %p148
      %p150 = scmp.ne.s32.totalorder %s136, %s137
      %p151 = scmp.eq.s32.totalorder %s19, 1
      %p152 = por %p150, %p151
      %p154 = scmp.ne.s32.totalorder %s137, %s153
      %p155 = scmp.eq.s32.totalorder %s19, 0
      %p156 = por %p154, %p155
      %p157 = scmp.le.s32.totalorder 1, %s13
      %p158 = scmp.lt.s32.totalorder %s13, 3
      %p159 = pnand %p157, %p158
      %p160 = pneg %p159
      // Predicated region
      $region9: #{tpu_custom_call.1} parent=5 // pred_check
        _
      $region10: #{tpu_custom_call.1} parent=5 // pred_check_branch
        %162 = sbr.rel (%p159) target = $region12
      $region11: #{tpu_custom_call.1} parent=5 // pred_region
        %s163 = ssub.s32 %s13, 1
        // Predicated region
        $region13: #{tpu_custom_call.1} parent=11 // pred_check
          %p164 = pneg %p39
        $region14: #{tpu_custom_call.1} parent=11 // pred_check_branch
          %166 = sbr.rel (%p164) target = $region16
        $region15: #{tpu_custom_call.1} parent=11 // pred_region
          %s168 = ssub.s32 1024, 1024
          %169 = vsyncadd [#allocation3], %s168
          %s170 = smul.addr %s18, 8
          %s171 = smul.addr %s170, 128
          %s172 = scalar_lea.hbm %s0, %s171
          %s173 = sshll.u32 [#allocation2], 4
          %s174 = int_to_ptr.vmem [resolvable:$true] %s173
          %179 = dma.hbm_to_vmem [thread:$0]  %s172, 1024, %s174, [#allocation3], 256, 256, 16
        $region16: #{tpu_custom_call.1} parent=11 // pred_fallthru
          _
        // Predicated region
        $region17: #{tpu_custom_call.1} parent=11 // pred_check
          %p180 = pneg %p60
        $region18: #{tpu_custom_call.1} parent=11 // pred_check_branch
          %182 = sbr.rel (%p180) target = $region20
        $region19: #{tpu_custom_call.1} parent=11 // pred_region
          _
        $region20: #{tpu_custom_call.1} parent=11 // pred_fallthru
          _
        // Predicated region
        $region21: #{tpu_custom_call.1} parent=11 // pred_check
          %p183 = pneg %p81
        $region22: #{tpu_custom_call.1} parent=11 // pred_check_branch
          %185 = sbr.rel (%p183) target = $region24
        $region23: #{tpu_custom_call.1} parent=11 // pred_region
          _
        $region24: #{tpu_custom_call.1} parent=11 // pred_fallthru
          _
        // Predicated region
        $region25: #{tpu_custom_call.1} parent=11 // pred_check
          %p186 = pneg %p102
        $region26: #{tpu_custom_call.1} parent=11 // pred_check_branch
          %188 = sbr.rel (%p186) target = $region28
        $region27: #{tpu_custom_call.1} parent=11 // pred_region
          _
        $region28: #{tpu_custom_call.1} parent=11 // pred_fallthru
          _
        // Predicated region
        $region29: #{tpu_custom_call.1} parent=11 // pred_check
          %p189 = pneg %p123
        $region30: #{tpu_custom_call.1} parent=11 // pred_check_branch
          %191 = sbr.rel (%p189) target = $region32
        $region31: #{tpu_custom_call.1} parent=11 // pred_region
          _
        $region32: #{tpu_custom_call.1} parent=11 // pred_fallthru
          _
      $region12: #{tpu_custom_call.1} parent=5 // pred_fallthru
        _
      %p192 = scmp.lt.s32.totalorder %s13, 2
      // Predicated region
      $region33: #{tpu_custom_call.1} parent=5 // pred_check
        %p193 = pneg %p192
      $region34: #{tpu_custom_call.1} parent=5 // pred_check_branch
        %195 = sbr.rel (%p193) target = $region36
      $region35: #{tpu_custom_call.1} parent=5 // pred_region
        _
      $region36: #{tpu_custom_call.1} parent=5 // pred_fallthru
        _
      %p196 = scmp.le.s32.totalorder 1, %s13
      %p197 = scmp.lt.s32.totalorder %s13, 3
      %p198 = pnand %p196, %p197
      %p199 = pneg %p198
      // Predicated region
      $region37: #{tpu_custom_call.1} parent=5 // pred_check
        _
      $region38: #{tpu_custom_call.1} parent=5 // pred_check_branch
        %201 = sbr.rel (%p198) target = $region40
      $region39: #{tpu_custom_call.1} parent=5 // pred_region
        %s202 = ssub.s32 %s13, 1
        // Predicated region
        $region41: #{tpu_custom_call.1} parent=39 // pred_check
          %p203 = pneg %p39
        $region42: #{tpu_custom_call.1} parent=39 // pred_check_branch
          %205 = sbr.rel (%p203) target = $region44
        $region43: #{tpu_custom_call.1} parent=39 // pred_region
          %206 = dma.done [#allocation3], 1024
        $region44: #{tpu_custom_call.1} parent=39 // pred_fallthru
          _
        %p207 = pneg %p39
        %p208 = pneg %p36
        %p209 = pneg %p60
        %p210 = pneg %p57
        %p211 = pneg %p81
        %p212 = pneg %p78
        %p213 = pneg %p102
        %p214 = pneg %p99
        %p215 = pneg %p123
        %p216 = pneg %p120
        %p217 = pneg %p149
        %p218 = pneg %p146
        %v219 = vld [vmem:[#allocation2] sm:$0xff]
        %v220 = vld [vmem:[#allocation2 + $0x8] sm:$0xff]
        %v221 = vld [vmem:[#allocation2 + $0x10] sm:$0xff]
        %v222 = vld [vmem:[#allocation2 + $0x18] sm:$0xff]
        %v223 = vld [vmem:[#allocation2 + $0x20] sm:$0xff]
        %v224 = vld [vmem:[#allocation2 + $0x28] sm:$0xff]
        %v225 = vld [vmem:[#allocation2 + $0x30] sm:$0xff]
        %v226 = vld [vmem:[#allocation2 + $0x38] sm:$0xff]
        %v227 = vadd.f32 %v219, %v220
        %228 = vadd.xlane.f32.xlu0 %v227
        %v229 = vpop.xlane.xlu0 %228
        %v230 = vadd.f32 %v221, %v222
        %231 = vadd.xlane.f32.xlu0 %v230
        %v232 = vpop.xlane.xlu0 %231
        %v233 = vadd.f32 %v223, %v224
        %234 = vadd.xlane.f32.xlu0 %v233
        %v235 = vpop.xlane.xlu0 %234
        %v236 = vadd.f32 %v225, %v226
        %237 = vadd.xlane.f32.xlu0 %v236
        %v238 = vpop.xlane.xlu0 %237
        %v239 = vmul.f32 %v229, 0.00390625
        %v240 = vmul.f32 %v232, 0.00390625
        %v241 = vmul.f32 %v235, 0.00390625
        %v242 = vmul.f32 %v238, 0.00390625
        %v243 = vmax.f32 %v219, %v220
        %244 = vmax.xlane.f32.xlu0 %v243
        %v245 = vpop.xlane.xlu0 %244
        %v246 = vmax.f32 %v221, %v222
        %247 = vmax.xlane.f32.xlu0 %v246
        %v248 = vpop.xlane.xlu0 %247
        %v249 = vmax.f32 %v223, %v224
        %250 = vmax.xlane.f32.xlu0 %v249
        %v251 = vpop.xlane.xlu0 %250
        %v252 = vmax.f32 %v225, %v226
        %253 = vmax.xlane.f32.xlu0 %v252
        %v254 = vpop.xlane.xlu0 %253
        %v255 = vld [vmem:[%s1] sm:$0x3]
        %v256 = vld [vmem:[%s2] sm:$0x3]
        %v257 = vld [vmem:[%s3] sm:$0xff]
        %v258 = vld [vmem:[%s3 + $0x8] sm:$0xff]
        %v259 = vld [vmem:[%s3 + $0x10] sm:$0xff]
        %v260 = vld [vmem:[%s3 + $0x18] sm:$0xff]
        %v261 = vld [vmem:[%s4] sm:$0xff]
        %v262 = vld [vmem:[%s4 + $0x8] sm:$0xff]
        %v263 = vld [vmem:[%s4 + $0x10] sm:$0xff]
        %v264 = vld [vmem:[%s4 + $0x18] sm:$0xff]
        %v265 = vlaneseq
        %v266 = vand.u32 %v265, 127
        %vm267 = vcmp.eq.s32.totalorder %v266, 0
        %v268 = vsel %vm267, %v239, %v245
        %v269 = vsel %vm267, %v240, %v248
        %v270 = vsel %vm267, %v241, %v251
        %v271 = vsel %vm267, %v242, %v254
        %273 = vset.pattern.permute.xlu0 0
        %274 = vperm.xlu0 %273, %v256
        %v275 = vpop.permute.xlu0 %274
        %vm277 = vcmask 261120
        %v279 = vsel %vm277, %v255, 0
        %281 = vmatprep.subr.mxu0 0.0
        %282 = vmatpush1.msra.mxu0 0.0
        %283 = vmatprep.subr.mxu0 0.0
        %284 = vmatpush1.msra.mxu0 0.0
        %285 = vmatprep.subr.mxu0 0.0
        %286 = vmatpush1.msra.mxu0 0.0
        %287 = vmatprep.subr.mxu0 0.0
        %288 = vmatpush1.msra.mxu0 0.0
        %289 = vmatprep.subr.mxu0 0.0
        %290 = vmatpush1.msra.mxu0 0.0
        %291 = vmatprep.subr.mxu0 0.0
        %292 = vmatpush1.msra.mxu0 0.0
        %293 = vmatprep.subr.mxu0 0.0
        %294 = vmatpush1.msra.mxu0 0.0
        %295 = vmatprep.subr.mxu0 0.0
        %296 = vmatpush1.msra.mxu0 0.0
        %297 = vmatprep.subr.mxu0 0.0
        %298 = vmatpush1.msra.mxu0 0.0
        %299 = vmatprep.subr.mxu0 0.0
        %300 = vmatpush1.msra.mxu0 0.0
        %301 = vmatprep.subr.mxu0 0.0
        %302 = vmatpush1.msra.mxu0 0.0
        %303 = vmatprep.subr.mxu0 0.0
        %304 = vmatpush1.msra.mxu0 0.0
        %305 = vmatprep.subr.mxu0 0.0
        %306 = vmatpush1.msra.mxu0 %v271
        %307 = vmatprep.subr.mxu0 0.0
        %308 = vmatpush1.msra.mxu0 %v270
        %309 = vmatprep.subr.mxu0 0.0
        %310 = vmatpush1.msra.mxu0 %v269
        %311 = vmatprep.subr.mxu0 0.0
        %312 = vmatpush1.msra.mxu0 %v268
        %313 = vmatprep.subr.mxu0 0.0
        %314 = vmatpush2.msra.mxu0 0.0
        %315 = vmatprep.subr.mxu0 0.0
        %316 = vmatpush2.msra.mxu0 0.0
        %317 = vmatprep.subr.mxu0 0.0
        %318 = vmatpush2.msra.mxu0 0.0
        %319 = vmatprep.subr.mxu0 0.0
        %320 = vmatpush2.msra.mxu0 0.0
        %321 = vmatprep.subr.mxu0 0.0
        %322 = vmatpush2.msra.mxu0 0.0
        %323 = vmatprep.subr.mxu0 0.0
        %324 = vmatpush2.msra.mxu0 0.0
        %325 = vmatprep.subr.mxu0 0.0
        %326 = vmatpush2.msra.mxu0 0.0
        %327 = vmatprep.subr.mxu0 0.0
        %328 = vmatpush2.msra.mxu0 0.0
        %329 = vmatprep.subr.mxu0 0.0
        %330 = vmatpush2.msra.mxu0 0.0
        %331 = vmatprep.subr.mxu0 0.0
        %332 = vmatpush2.msra.mxu0 0.0
        %333 = vmatprep.subr.mxu0 0.0
        %334 = vmatpush2.msra.mxu0 0.0
        %335 = vmatprep.subr.mxu0 0.0
        %336 = vmatpush2.msra.mxu0 0.0
        %337 = vmatprep.subr.mxu0 0.0
        %338 = vmatpush2.msra.mxu0 0.0
        %339 = vmatprep.subr.mxu0 0.0
        %340 = vmatpush2.msra.mxu0 0.0
        %341 = vmatprep.subr.mxu0 0.0
        %342 = vmatpush2.msra.mxu0 0.0
        %343 = vmatprep.subr.mxu0 0.0
        %344 = vmatpush2.msra.mxu0 0.0
        %345 = vmatprep.mubr.f32.mxu0 0.0
        %346 = vmatmul.mubr.f32.gmra.mxu0 %v279
        %v347 = vpop.f32.mrf.mxu0
        %v348 = vadd.f32 %v275, %v347
        %v349 = vpop.f32.mrf.mxu0
        %350 = vdwg.mxu0
        %v351 = vmax.f32 %v348, 0.0
        %353 = vset.pattern.permute.xlu0 0
        %354 = vperm.xlu0 %353, %v261
        %v355 = vpop.permute.xlu0 %354
        %358 = vset.pattern.permute.xlu0 0
        %359 = vperm.xlu0 %358, %v262
        %v360 = vpop.permute.xlu0 %359
        %363 = vset.pattern.permute.xlu0 0
        %364 = vperm.xlu0 %363, %v263
        %v365 = vpop.permute.xlu0 %364
        %368 = vset.pattern.permute.xlu0 0
        %369 = vperm.xlu0 %368, %v264
        %v370 = vpop.permute.xlu0 %369
        %vm372 = vcmask 15360
        %v374 = vsel %vm372, %v257, 0
        %v377 = vsel %vm372, %v258, 0
        %v380 = vsel %vm372, %v259, 0
        %v383 = vsel %vm372, %v260, 0
        %vm385 = vcmask 1041408
        %v387 = vsel %vm385, %v351, 0
        %389 = vmatprep.subr.mxu0 0.0
        %390 = vmatpush1.msra.mxu0 0.0
        %391 = vmatprep.subr.mxu0 0.0
        %392 = vmatpush1.msra.mxu0 0.0
        %393 = vmatprep.subr.mxu0 0.0
        %394 = vmatpush1.msra.mxu0 0.0
        %395 = vmatprep.subr.mxu0 0.0
        %396 = vmatpush1.msra.mxu0 0.0
        %397 = vmatprep.subr.mxu0 0.0
        %398 = vmatpush1.msra.mxu0 0.0
        %399 = vmatprep.subr.mxu0 0.0
        %400 = vmatpush1.msra.mxu0 0.0
        %401 = vmatprep.subr.mxu0 0.0
        %402 = vmatpush1.msra.mxu0 0.0
        %403 = vmatprep.subr.mxu0 0.0
        %404 = vmatpush1.msra.mxu0 0.0
        %405 = vmatprep.subr.mxu0 0.0
        %406 = vmatpush1.msra.mxu0 0.0
        %407 = vmatprep.subr.mxu0 0.0
        %408 = vmatpush1.msra.mxu0 0.0
        %409 = vmatprep.subr.mxu0 0.0
        %410 = vmatpush1.msra.mxu0 0.0
        %411 = vmatprep.subr.mxu0 0.0
        %412 = vmatpush1.msra.mxu0 0.0
        %413 = vmatprep.subr.mxu0 0.0
        %414 = vmatpush1.msra.mxu0 0.0
        %415 = vmatprep.subr.mxu0 0.0
        %416 = vmatpush1.msra.mxu0 0.0
        %417 = vmatprep.subr.mxu0 0.0
        %418 = vmatpush1.msra.mxu0 0.0
        %419 = vmatprep.subr.mxu0 0.0
        %420 = vmatpush1.msra.mxu0 %v387
        %421 = vmatprep.subr.mxu0 0.0
        %422 = vmatpush2.msra.mxu0 0.0
        %423 = vmatprep.subr.mxu0 0.0
        %424 = vmatpush2.msra.mxu0 0.0
        %425 = vmatprep.subr.mxu0 0.0
        %426 = vmatpush2.msra.mxu0 0.0
        %427 = vmatprep.subr.mxu0 0.0
        %428 = vmatpush2.msra.mxu0 0.0
        %429 = vmatprep.subr.mxu0 0.0
        %430 = vmatpush2.msra.mxu0 0.0
        %431 = vmatprep.subr.mxu0 0.0
        %432 = vmatpush2.msra.mxu0 0.0
        %433 = vmatprep.subr.mxu0 0.0
        %434 = vmatpush2.msra.mxu0 0.0
        %435 = vmatprep.subr.mxu0 0.0
        %436 = vmatpush2.msra.mxu0 0.0
        %437 = vmatprep.subr.mxu0 0.0
        %438 = vmatpush2.msra.mxu0 0.0
        %439 = vmatprep.subr.mxu0 0.0
        %440 = vmatpush2.msra.mxu0 0.0
        %441 = vmatprep.subr.mxu0 0.0
        %442 = vmatpush2.msra.mxu0 0.0
        %443 = vmatprep.subr.mxu0 0.0
        %444 = vmatpush2.msra.mxu0 0.0
        %445 = vmatprep.subr.mxu0 0.0
        %446 = vmatpush2.msra.mxu0 0.0
        %447 = vmatprep.subr.mxu0 0.0
        %448 = vmatpush2.msra.mxu0 0.0
        %449 = vmatprep.subr.mxu0 0.0
        %450 = vmatpush2.msra.mxu0 0.0
        %451 = vmatprep.subr.mxu0 0.0
        %452 = vmatpush2.msra.mxu0 0.0
        %453 = vmatprep.mubr.f32.mxu0 0.0
        %454 = vmatmul.mubr.f32.gmra.mxu0 %v374
        %v455 = vpop.f32.mrf.mxu0
        %v456 = vadd.f32 %v355, %v455
        %v457 = vpop.f32.mrf.mxu0
        %458 = vmatprep.mubr.f32.mxu0 0.0
        %459 = vmatmul.mubr.f32.gmra.mxu0 %v377
        %v460 = vpop.f32.mrf.mxu0
        %v461 = vadd.f32 %v360, %v460
        %v462 = vpop.f32.mrf.mxu0
        %463 = vmatprep.mubr.f32.mxu0 0.0
        %464 = vmatmul.mubr.f32.gmra.mxu0 %v380
        %v465 = vpop.f32.mrf.mxu0
        %v466 = vadd.f32 %v365, %v465
        %v467 = vpop.f32.mrf.mxu0
        %468 = vmatprep.mubr.f32.mxu0 0.0
        %469 = vmatmul.mubr.f32.gmra.mxu0 %v383
        %v470 = vpop.f32.mrf.mxu0
        %v471 = vadd.f32 %v370, %v470
        %v472 = vpop.f32.mrf.mxu0
        %473 = vdwg.mxu0
        %v474 = vsel %vm372, %v456, 0.0
        %475 = vadd.xlane.f32.xlu0 %v474
        %v476 = vpop.xlane.xlu0 %475
        %v477 = vsel %vm372, %v461, 0.0
        %478 = vadd.xlane.f32.xlu0 %v477
        %v479 = vpop.xlane.xlu0 %478
        %v480 = vsel %vm372, %v466, 0.0
        %481 = vadd.xlane.f32.xlu0 %v480
        %v482 = vpop.xlane.xlu0 %481
        %v483 = vsel %vm372, %v471, 0.0
        %484 = vadd.xlane.f32.xlu0 %v483
        %v485 = vpop.xlane.xlu0 %484
        %v486 = vxor.u32 %v476, 2147483648
        %v487 = vxor.u32 %v479, 2147483648
        %v488 = vxor.u32 %v482, 2147483648
        %v489 = vxor.u32 %v485, 2147483648
        %v490 = vmul.f32 %v486, 1.442695
        %v491 = vpow.pop %v490
        %v492 = vmul.f32 %v487, 1.442695
        %v493 = vpow.pop %v492
        %v494 = vmul.f32 %v488, 1.442695
        %v495 = vpow.pop %v494
        %v496 = vmul.f32 %v489, 1.442695
        %v497 = vpow.pop %v496
        %v498 = vadd.f32 %v491, 1.0
        %v499 = vadd.f32 %v493, 1.0
        %v500 = vadd.f32 %v495, 1.0
        %v501 = vadd.f32 %v497, 1.0
        %v502 = vrcp.pop %v498
        %v503 = vmul.f32 1.0, %v502
        %v504 = vrcp.pop %v499
        %v505 = vmul.f32 1.0, %v504
        %v506 = vrcp.pop %v500
        %v507 = vmul.f32 1.0, %v506
        %v508 = vrcp.pop %v501
        %v509 = vmul.f32 1.0, %v508
        %v510 = vmul.f32 %v219, %v503
        %v511 = vmul.f32 %v220, %v503
        %v512 = vmul.f32 %v221, %v505
        %v513 = vmul.f32 %v222, %v505
        %v514 = vmul.f32 %v223, %v507
        %v515 = vmul.f32 %v224, %v507
        %v516 = vmul.f32 %v225, %v509
        %v517 = vmul.f32 %v226, %v509
        %518 = vst [vmem:[#allocation5] sm:$0xff] %v510
        %519 = vst [vmem:[#allocation5 + $0x8] sm:$0xff] %v511
        %520 = vst [vmem:[#allocation5 + $0x10] sm:$0xff] %v512
        %521 = vst [vmem:[#allocation5 + $0x18] sm:$0xff] %v513
        %522 = vst [vmem:[#allocation5 + $0x20] sm:$0xff] %v514
        %523 = vst [vmem:[#allocation5 + $0x28] sm:$0xff] %v515
        %524 = vst [vmem:[#allocation5 + $0x30] sm:$0xff] %v516
        %525 = vst [vmem:[#allocation5 + $0x38] sm:$0xff] %v517
        // Predicated region
        $region45: #{tpu_custom_call.1} parent=39 // pred_check
          %p526 = pneg %p146
        $region46: #{tpu_custom_call.1} parent=39 // pred_check_branch
          %528 = sbr.rel (%p526) target = $region48
        $region47: #{tpu_custom_call.1} parent=39 // pred_region
          %s530 = ssub.s32 1024, 1024
          %531 = vsyncadd [#allocation4], %s530
          %s532 = smul.addr %s18, 8
          %s533 = smul.addr %s532, 128
          %s534 = scalar_lea.hbm %s5, %s533
          %s535 = sshll.u32 [#allocation5], 4
          %s536 = int_to_ptr.vmem [resolvable:$true] %s535
          %541 = dma.vmem_to_hbm [thread:$0]  %s536, 1024, %s534, [#allocation4], 256, 256, 16
        $region48: #{tpu_custom_call.1} parent=39 // pred_fallthru
          _
        // Predicated region
        $region49: #{tpu_custom_call.1} parent=39 // pred_check
          %p542 = pneg %p146
        $region50: #{tpu_custom_call.1} parent=39 // pred_check_branch
          %544 = sbr.rel (%p542) target = $region52
        $region51: #{tpu_custom_call.1} parent=39 // pred_region
          %545 = dma.done [#allocation4], 1024
        $region52: #{tpu_custom_call.1} parent=39 // pred_fallthru
          _
      $region40: #{tpu_custom_call.1} parent=5 // pred_fallthru
        _
      %p546 = scmp.le.s32.totalorder 2, %s13
      // Predicated region
      $region53: #{tpu_custom_call.1} parent=5 // pred_check
        %p547 = pneg %p546
      $region54: #{tpu_custom_call.1} parent=5 // pred_check_branch
        %549 = sbr.rel (%p547) target = $region56
      $region55: #{tpu_custom_call.1} parent=5 // pred_region
        %s550 = ssub.s32 %s13, 2
      $region56: #{tpu_custom_call.1} parent=5 // pred_fallthru
        _
    $region6: #{tpu_custom_call.1} parent=1 // loop_footer
      %s17 = sadd.s32 1, %s13
    $region7: #{tpu_custom_call.1} parent=1 // loop_footer_branch
      %12 = sbr.rel target = $region3
    $region8: #{tpu_custom_call.1} parent=1 // loop_exit
      _
    %551 = vsyncpa [#allocation3], 1
    %s552 = scalar_lea.sflag [#allocation3], 1
    %553 = vsyncpa %s552, 1
    %554 = vsyncpa [#allocation4], 1
    %s555 = scalar_lea.sflag [#allocation4], 1
    %556 = vsyncpa %s555, 1

// kernel: tpu_custom_call.1
$region0: #{tpu_custom_call.1}
  #allocation0 [shape = 'u32[]', space=smem, size = 0x4, offset = 0x4, fixed_abs, tag = 'smem constant byte address 0x4 - core index']
  #allocation1 [shape = 'u32[144,128]{1,0:T(1,128)}', space=vmem, size = 0x12000, scoped, tag = 'internal scratch']
  %s0 = inlined_call_operand.hbm [shape: f32[2,32,256], index: 0, kind: input, shape index: {}]
  %s1 = inlined_call_operand.vmem [shape: f32[2,32], index: 1, kind: input, shape index: {}]
  %s2 = inlined_call_operand.vmem [shape: f32[2,1], index: 2, kind: input, shape index: {}]
  %s3 = inlined_call_operand.vmem [shape: f32[32,2], index: 3, kind: input, shape index: {}]
  %s4 = inlined_call_operand.vmem [shape: f32[32,1], index: 4, kind: input, shape index: {}]
  %s5 = inlined_call_operand.hbm [shape: f32[2,32,256], index: 5, kind: output, shape index: {}]
  %s6 = sld [smem:[#allocation0]]
  $region57: #{tpu_custom_call.1} parent=0
    _
  %s8 = ssub.s32 1, %s6
  %s9 = scalar_select 0, %s8, %s6
  $region1: #{tpu_custom_call.1} parent=0
    #allocation2 [shape = 'u8[65536]{0}', space=vmem, size = 0x10000, scoped, tag = 'input window, operand 0']
    #allocation3 [shape = 's32[2]{0}', space=sflag, size = 0x8, scoped, tag = 'scoped memory for tpu_custom_call.1']
    #allocation4 [shape = 's32[2]{0}', space=sflag, size = 0x8, scoped, tag = 'scoped memory for tpu_custom_call.1']
    #allocation5 [shape = 'u8[65536]{0}', space=vmem, size = 0x10000, scoped, tag = 'output window, operand 0']
    %10 = vsyncpa [#allocation3], 0
    %s11 = scalar_lea.sflag [#allocation3], 1
    %12 = vsyncpa %s11, 0
    %13 = vsyncpa [#allocation4], 0
    %s14 = scalar_lea.sflag [#allocation4], 1
    %15 = vsyncpa %s14, 0
    loop: start=0, step=1, limit=4
    $region2: #{tpu_custom_call.1} parent=1 // loop_pre_header
      _
    $region3: #{tpu_custom_call.1} parent=1 // loop_header
      %s17 = sphi 0, %s21
      %p18 = scmp.ge.s32.totalorder %s17, 4
      %s27 = sphi 0, %s29
      %s30 = sphi 0, %s27
      %s31 = sphi 0, %s30
      %s47 = sphi 0, %s31
      %s51 = sphi 0, %s51
      %s53 = sphi 0, %s51
      %s54 = sphi 0, %s53
      %s68 = sphi 0, %s54
      %s72 = sphi 0, %s72
      %s74 = sphi 0, %s72
      %s75 = sphi 0, %s74
      %s89 = sphi 0, %s75
      %s93 = sphi 0, %s93
      %s95 = sphi 0, %s93
      %s96 = sphi 0, %s95
      %s110 = sphi 0, %s96
      %s114 = sphi 0, %s114
      %s116 = sphi 0, %s114
      %s117 = sphi 0, %s116
      %s131 = sphi 0, %s117
      %s137 = sphi 0, %s139
      %s140 = sphi 0, %s137
      %s141 = sphi 0, %s140
      %s157 = sphi 0, %s141
    $region4: #{tpu_custom_call.1} parent=1 // loop_header_branch
      %20 = sbr.rel (%p18) target = $region8
    $region5: #{tpu_custom_call.1} parent=1 // loop_body
      %s22 = ssub.s32 %s17, 1
      %s23 = ssub.s32 %s17, 2
      %s24 = sadd.s32 %s17, 1
      %s25 = ssub.s32 %s17, %s24
      %p26 = scmp.eq.s32.totalorder %s25, 0
      %s28 = sadd.s32 %s27, 1
      %s29 = scalar_select %p26, %s27, %s28
      %p32 = pneg %p26
      %p33 = scmp.eq.s32.totalorder %s17, 1
      %p34 = por %p32, %p33
      %p35 = scmp.ne.s32.totalorder %s27, %s30
      %p36 = scmp.eq.s32.totalorder %s17, 0
      %p37 = por %p35, %p36
      %p38 = scmp.ne.s32.totalorder %s27, %s30
      %p39 = scmp.eq.s32.totalorder %s22, 1
      %p40 = por %p38, %p39
      %p41 = scmp.ne.s32.totalorder %s30, %s31
      %p42 = scmp.eq.s32.totalorder %s22, 0
      %p43 = por %p41, %p42
      %p44 = scmp.ne.s32.totalorder %s30, %s31
      %p45 = scmp.eq.s32.totalorder %s23, 1
      %p46 = por %p44, %p45
      %p48 = scmp.ne.s32.totalorder %s31, %s47
      %p49 = scmp.eq.s32.totalorder %s23, 0
      %p50 = por %p48, %p49
      %s52 = sadd.s32 %s51, 1
      %p55 = scmp.eq.s32.totalorder %s17, 1
      %p56 = scmp.ne.s32.totalorder %s51, %s53
      %p57 = scmp.eq.s32.totalorder %s17, 0
      %p58 = por %p56, %p57
      %p59 = scmp.ne.s32.totalorder %s51, %s53
      %p60 = scmp.eq.s32.totalorder %s22, 1
      %p61 = por %p59, %p60
      %p62 = scmp.ne.s32.totalorder %s53, %s54
      %p63 = scmp.eq.s32.totalorder %s22, 0
      %p64 = por %p62, %p63
      %p65 = scmp.ne.s32.totalorder %s53, %s54
      %p66 = scmp.eq.s32.totalorder %s23, 1
      %p67 = por %p65, %p66
      %p69 = scmp.ne.s32.totalorder %s54, %s68
      %p70 = scmp.eq.s32.totalorder %s23, 0
      %p71 = por %p69, %p70
      %s73 = sadd.s32 %s72, 1
      %p76 = scmp.eq.s32.totalorder %s17, 1
      %p77 = scmp.ne.s32.totalorder %s72, %s74
      %p78 = scmp.eq.s32.totalorder %s17, 0
      %p79 = por %p77, %p78
      %p80 = scmp.ne.s32.totalorder %s72, %s74
      %p81 = scmp.eq.s32.totalorder %s22, 1
      %p82 = por %p80, %p81
      %p83 = scmp.ne.s32.totalorder %s74, %s75
      %p84 = scmp.eq.s32.totalorder %s22, 0
      %p85 = por %p83, %p84
      %p86 = scmp.ne.s32.totalorder %s74, %s75
      %p87 = scmp.eq.s32.totalorder %s23, 1
      %p88 = por %p86, %p87
      %p90 = scmp.ne.s32.totalorder %s75, %s89
      %p91 = scmp.eq.s32.totalorder %s23, 0
      %p92 = por %p90, %p91
      %s94 = sadd.s32 %s93, 1
      %p97 = scmp.eq.s32.totalorder %s17, 1
      %p98 = scmp.ne.s32.totalorder %s93, %s95
      %p99 = scmp.eq.s32.totalorder %s17, 0
      %p100 = por %p98, %p99
      %p101 = scmp.ne.s32.totalorder %s93, %s95
      %p102 = scmp.eq.s32.totalorder %s22, 1
      %p103 = por %p101, %p102
      %p104 = scmp.ne.s32.totalorder %s95, %s96
      %p105 = scmp.eq.s32.totalorder %s22, 0
      %p106 = por %p104, %p105
      %p107 = scmp.ne.s32.totalorder %s95, %s96
      %p108 = scmp.eq.s32.totalorder %s23, 1
      %p109 = por %p107, %p108
      %p111 = scmp.ne.s32.totalorder %s96, %s110
      %p112 = scmp.eq.s32.totalorder %s23, 0
      %p113 = por %p111, %p112
      %s115 = sadd.s32 %s114, 1
      %p118 = scmp.eq.s32.totalorder %s17, 1
      %p119 = scmp.ne.s32.totalorder %s114, %s116
      %p120 = scmp.eq.s32.totalorder %s17, 0
      %p121 = por %p119, %p120
      %p122 = scmp.ne.s32.totalorder %s114, %s116
      %p123 = scmp.eq.s32.totalorder %s22, 1
      %p124 = por %p122, %p123
      %p125 = scmp.ne.s32.totalorder %s116, %s117
      %p126 = scmp.eq.s32.totalorder %s22, 0
      %p127 = por %p125, %p126
      %p128 = scmp.ne.s32.totalorder %s116, %s117
      %p129 = scmp.eq.s32.totalorder %s23, 1
      %p130 = por %p128, %p129
      %p132 = scmp.ne.s32.totalorder %s117, %s131
      %p133 = scmp.eq.s32.totalorder %s23, 0
      %p134 = por %p132, %p133
      %s135 = ssub.s32 %s17, %s24
      %p136 = scmp.eq.s32.totalorder %s135, 0
      %s138 = sadd.s32 %s137, 1
      %s139 = scalar_select %p136, %s137, %s138
      %p142 = pneg %p136
      %p143 = scmp.eq.s32.totalorder %s17, 1
      %p144 = por %p142, %p143
      %p145 = scmp.ne.s32.totalorder %s137, %s140
      %p146 = scmp.eq.s32.totalorder %s17, 0
      %p147 = por %p145, %p146
      %p148 = scmp.ne.s32.totalorder %s137, %s140
      %p149 = scmp.eq.s32.totalorder %s22, 1
      %p150 = por %p148, %p149
      %p151 = scmp.ne.s32.totalorder %s140, %s141
      %p152 = scmp.eq.s32.totalorder %s22, 0
      %p153 = por %p151, %p152
      %p154 = scmp.ne.s32.totalorder %s140, %s141
      %p155 = scmp.eq.s32.totalorder %s23, 1
      %p156 = por %p154, %p155
      %p158 = scmp.ne.s32.totalorder %s141, %s157
      %p159 = scmp.eq.s32.totalorder %s23, 0
      %p160 = por %p158, %p159
      %p161 = scmp.le.s32.totalorder 1, %s17
      %p162 = scmp.lt.s32.totalorder %s17, 3
      %p163 = pnand %p161, %p162
      %p164 = pneg %p163
      // Predicated region
      $region9: #{tpu_custom_call.1} parent=5 // pred_check
        _
      $region10: #{tpu_custom_call.1} parent=5 // pred_check_branch
        %166 = sbr.rel (%p163) target = $region12
      $region11: #{tpu_custom_call.1} parent=5 // pred_region
        %s167 = ssub.s32 %s17, 1
        // Predicated region
        $region13: #{tpu_custom_call.1} parent=11 // pred_check
          %p168 = pneg %p64
        $region14: #{tpu_custom_call.1} parent=11 // pred_check_branch
          %170 = sbr.rel (%p168) target = $region16
        $region15: #{tpu_custom_call.1} parent=11 // pred_region
          _
        $region16: #{tpu_custom_call.1} parent=11 // pred_fallthru
          _
        // Predicated region
        $region17: #{tpu_custom_call.1} parent=11 // pred_check
          %p171 = pneg %p85
        $region18: #{tpu_custom_call.1} parent=11 // pred_check_branch
          %173 = sbr.rel (%p171) target = $region20
        $region19: #{tpu_custom_call.1} parent=11 // pred_region
          _
        $region20: #{tpu_custom_call.1} parent=11 // pred_fallthru
          _
        // Predicated region
        $region21: #{tpu_custom_call.1} parent=11 // pred_check
          %p174 = pneg %p106
        $region22: #{tpu_custom_call.1} parent=11 // pred_check_branch
          %176 = sbr.rel (%p174) target = $region24
        $region23: #{tpu_custom_call.1} parent=11 // pred_region
          _
        $region24: #{tpu_custom_call.1} parent=11 // pred_fallthru
          _
        // Predicated region
        $region25: #{tpu_custom_call.1} parent=11 // pred_check
          %p177 = pneg %p127
        $region26: #{tpu_custom_call.1} parent=11 // pred_check_branch
          %179 = sbr.rel (%p177) target = $region28
        $region27: #{tpu_custom_call.1} parent=11 // pred_region
          _
        $region28: #{tpu_custom_call.1} parent=11 // pred_fallthru
          _
      $region12: #{tpu_custom_call.1} parent=5 // pred_fallthru
        _
      %p180 = scmp.lt.s32.totalorder %s17, 2
      // Predicated region
      $region29: #{tpu_custom_call.1} parent=5 // pred_check
        %p181 = pneg %p180
      $region30: #{tpu_custom_call.1} parent=5 // pred_check_branch
        %183 = sbr.rel (%p181) target = $region32
      $region31: #{tpu_custom_call.1} parent=5 // pred_region
        // Predicated region
        $region33: #{tpu_custom_call.1} parent=31 // pred_check
          %p184 = pneg %p37
        $region34: #{tpu_custom_call.1} parent=31 // pred_check_branch
          %186 = sbr.rel (%p184) target = $region36
        $region35: #{tpu_custom_call.1} parent=31 // pred_region
          %s187 = sand.u32 %s27, 1
          %s188 = scalar_lea.sflag [#allocation3], %s187
          %s189 = sand.u32 %s27, 1
          %s190 = smul.addr %s189, 64
          %s191 = scalar_lea.vmem [#allocation2], %s190
          %s193 = ssub.s32 1024, 1024
          %194 = vsyncadd %s188, %s193
          %s195 = smul.addr %s17, 8
          %s196 = smul.addr %s195, 128
          %s197 = scalar_lea.hbm %s0, %s196
          %s198 = sshll.u32 %s191, 4
          %s199 = int_to_ptr.vmem [resolvable:$true] %s198
          %204 = dma.hbm_to_vmem [thread:$0]  %s197, 1024, %s199, %s188, 256, 256, 16
        $region36: #{tpu_custom_call.1} parent=31 // pred_fallthru
          _
      $region32: #{tpu_custom_call.1} parent=5 // pred_fallthru
        _
      %p205 = scmp.le.s32.totalorder 1, %s17
      %p206 = scmp.lt.s32.totalorder %s17, 3
      %p207 = pnand %p205, %p206
      %p208 = pneg %p207
      // Predicated region
      $region37: #{tpu_custom_call.1} parent=5 // pred_check
        _
      $region38: #{tpu_custom_call.1} parent=5 // pred_check_branch
        %210 = sbr.rel (%p207) target = $region40
      $region39: #{tpu_custom_call.1} parent=5 // pred_region
        %s211 = ssub.s32 %s17, 1
        %s212 = sand.u32 %s30, 1
        %s213 = scalar_lea.sflag [#allocation3], %s212
        %s214 = sand.u32 %s30, 1
        %s215 = smul.addr %s214, 64
        %s216 = scalar_lea.vmem [#allocation2], %s215
        // Predicated region
        $region41: #{tpu_custom_call.1} parent=39 // pred_check
          %p217 = pneg %p43
        $region42: #{tpu_custom_call.1} parent=39 // pred_check_branch
          %219 = sbr.rel (%p217) target = $region44
        $region43: #{tpu_custom_call.1} parent=39 // pred_region
          %220 = dma.done %s213, 1024
        $region44: #{tpu_custom_call.1} parent=39 // pred_fallthru
          _
        %s221 = sand.u32 %s30, 1
        %s222 = scalar_lea.sflag [#allocation3], %s221
        %s223 = sand.u32 %s30, 1
        %s224 = smul.addr %s223, 64
        %s225 = scalar_lea.vmem [#allocation2], %s224
        %p226 = pneg %p43
        %p227 = pneg %p40
        %p228 = pneg %p64
        %p229 = pneg %p61
        %p230 = pneg %p85
        %p231 = pneg %p82
        %p232 = pneg %p106
        %p233 = pneg %p103
        %p234 = pneg %p127
        %p235 = pneg %p124
        %p236 = pneg %p153
        %p237 = pneg %p150
        %s238 = sand.u32 %s140, 1
        %s239 = scalar_lea.sflag [#allocation4], %s238
        %s240 = sand.u32 %s140, 1
        %s241 = smul.addr %s240, 64
        %s242 = scalar_lea.vmem [#allocation5], %s241
        %v243 = vld [vmem:[%s216] sm:$0xff]
        %v244 = vld [vmem:[%s216 + $0x8] sm:$0xff]
        %v245 = vld [vmem:[%s216 + $0x10] sm:$0xff]
        %v246 = vld [vmem:[%s216 + $0x18] sm:$0xff]
        %v247 = vld [vmem:[%s216 + $0x20] sm:$0xff]
        %v248 = vld [vmem:[%s216 + $0x28] sm:$0xff]
        %v249 = vld [vmem:[%s216 + $0x30] sm:$0xff]
        %v250 = vld [vmem:[%s216 + $0x38] sm:$0xff]
        %v251 = vadd.f32 %v243, %v244
        %252 = vadd.xlane.f32.xlu0 %v251
        %v253 = vpop.xlane.xlu0 %252
        %v254 = vadd.f32 %v245, %v246
        %255 = vadd.xlane.f32.xlu0 %v254
        %v256 = vpop.xlane.xlu0 %255
        %v257 = vadd.f32 %v247, %v248
        %258 = vadd.xlane.f32.xlu0 %v257
        %v259 = vpop.xlane.xlu0 %258
        %v260 = vadd.f32 %v249, %v250
        %261 = vadd.xlane.f32.xlu0 %v260
        %v262 = vpop.xlane.xlu0 %261
        %v263 = vmul.f32 %v253, 0.00390625
        %v264 = vmul.f32 %v256, 0.00390625
        %v265 = vmul.f32 %v259, 0.00390625
        %v266 = vmul.f32 %v262, 0.00390625
        %v267 = vmax.f32 %v243, %v244
        %268 = vmax.xlane.f32.xlu0 %v267
        %v269 = vpop.xlane.xlu0 %268
        %v270 = vmax.f32 %v245, %v246
        %271 = vmax.xlane.f32.xlu0 %v270
        %v272 = vpop.xlane.xlu0 %271
        %v273 = vmax.f32 %v247, %v248
        %274 = vmax.xlane.f32.xlu0 %v273
        %v275 = vpop.xlane.xlu0 %274
        %v276 = vmax.f32 %v249, %v250
        %277 = vmax.xlane.f32.xlu0 %v276
        %v278 = vpop.xlane.xlu0 %277
        %v279 = vld [vmem:[%s1] sm:$0x3]
        %v280 = vld [vmem:[%s2] sm:$0x3]
        %v281 = vld [vmem:[%s3] sm:$0xff]
        %v282 = vld [vmem:[%s3 + $0x8] sm:$0xff]
        %v283 = vld [vmem:[%s3 + $0x10] sm:$0xff]
        %v284 = vld [vmem:[%s3 + $0x18] sm:$0xff]
        %v285 = vld [vmem:[%s4] sm:$0xff]
        %v286 = vld [vmem:[%s4 + $0x8] sm:$0xff]
        %v287 = vld [vmem:[%s4 + $0x10] sm:$0xff]
        %v288 = vld [vmem:[%s4 + $0x18] sm:$0xff]
        %v289 = vlaneseq
        %v290 = vand.u32 %v289, 127
        %vm291 = vcmp.eq.s32.totalorder %v290, 0
        %v292 = vsel %vm291, %v263, %v269
        %v293 = vsel %vm291, %v264, %v272
        %v294 = vsel %vm291, %v265, %v275
        %v295 = vsel %vm291, %v266, %v278
        %297 = vset.pattern.permute.xlu0 0
        %298 = vperm.xlu0 %297, %v280
        %v299 = vpop.permute.xlu0 %298
        %vm301 = vcmask 261120
        %v303 = vsel %vm301, %v279, 0
        %305 = vmatprep.subr.mxu0 0.0
        %306 = vmatpush1.msra.mxu0 0.0
        %307 = vmatprep.subr.mxu0 0.0
        %308 = vmatpush1.msra.mxu0 0.0
        %309 = vmatprep.subr.mxu0 0.0
        %310 = vmatpush1.msra.mxu0 0.0
        %311 = vmatprep.subr.mxu0 0.0
        %312 = vmatpush1.msra.mxu0 0.0
        %313 = vmatprep.subr.mxu0 0.0
        %314 = vmatpush1.msra.mxu0 0.0
        %315 = vmatprep.subr.mxu0 0.0
        %316 = vmatpush1.msra.mxu0 0.0
        %317 = vmatprep.subr.mxu0 0.0
        %318 = vmatpush1.msra.mxu0 0.0
        %319 = vmatprep.subr.mxu0 0.0
        %320 = vmatpush1.msra.mxu0 0.0
        %321 = vmatprep.subr.mxu0 0.0
        %322 = vmatpush1.msra.mxu0 0.0
        %323 = vmatprep.subr.mxu0 0.0
        %324 = vmatpush1.msra.mxu0 0.0
        %325 = vmatprep.subr.mxu0 0.0
        %326 = vmatpush1.msra.mxu0 0.0
        %327 = vmatprep.subr.mxu0 0.0
        %328 = vmatpush1.msra.mxu0 0.0
        %329 = vmatprep.subr.mxu0 0.0
        %330 = vmatpush1.msra.mxu0 %v295
        %331 = vmatprep.subr.mxu0 0.0
        %332 = vmatpush1.msra.mxu0 %v294
        %333 = vmatprep.subr.mxu0 0.0
        %334 = vmatpush1.msra.mxu0 %v293
        %335 = vmatprep.subr.mxu0 0.0
        %336 = vmatpush1.msra.mxu0 %v292
        %337 = vmatprep.subr.mxu0 0.0
        %338 = vmatpush2.msra.mxu0 0.0
        %339 = vmatprep.subr.mxu0 0.0
        %340 = vmatpush2.msra.mxu0 0.0
        %341 = vmatprep.subr.mxu0 0.0
        %342 = vmatpush2.msra.mxu0 0.0
        %343 = vmatprep.subr.mxu0 0.0
        %344 = vmatpush2.msra.mxu0 0.0
        %345 = vmatprep.subr.mxu0 0.0
        %346 = vmatpush2.msra.mxu0 0.0
        %347 = vmatprep.subr.mxu0 0.0
        %348 = vmatpush2.msra.mxu0 0.0
        %349 = vmatprep.subr.mxu0 0.0
        %350 = vmatpush2.msra.mxu0 0.0
        %351 = vmatprep.subr.mxu0 0.0
        %352 = vmatpush2.msra.mxu0 0.0
        %353 = vmatprep.subr.mxu0 0.0
        %354 = vmatpush2.msra.mxu0 0.0
        %355 = vmatprep.subr.mxu0 0.0
        %356 = vmatpush2.msra.mxu0 0.0
        %357 = vmatprep.subr.mxu0 0.0
        %358 = vmatpush2.msra.mxu0 0.0
        %359 = vmatprep.subr.mxu0 0.0
        %360 = vmatpush2.msra.mxu0 0.0
        %361 = vmatprep.subr.mxu0 0.0
        %362 = vmatpush2.msra.mxu0 0.0
        %363 = vmatprep.subr.mxu0 0.0
        %364 = vmatpush2.msra.mxu0 0.0
        %365 = vmatprep.subr.mxu0 0.0
        %366 = vmatpush2.msra.mxu0 0.0
        %367 = vmatprep.subr.mxu0 0.0
        %368 = vmatpush2.msra.mxu0 0.0
        %369 = vmatprep.mubr.f32.mxu0 0.0
        %370 = vmatmul.mubr.f32.gmra.mxu0 %v303
        %v371 = vpop.f32.mrf.mxu0
        %v372 = vadd.f32 %v299, %v371
        %v373 = vpop.f32.mrf.mxu0
        %374 = vdwg.mxu0
        %v375 = vmax.f32 %v372, 0.0
        %377 = vset.pattern.permute.xlu0 0
        %378 = vperm.xlu0 %377, %v285
        %v379 = vpop.permute.xlu0 %378
        %382 = vset.pattern.permute.xlu0 0
        %383 = vperm.xlu0 %382, %v286
        %v384 = vpop.permute.xlu0 %383
        %387 = vset.pattern.permute.xlu0 0
        %388 = vperm.xlu0 %387, %v287
        %v389 = vpop.permute.xlu0 %388
        %392 = vset.pattern.permute.xlu0 0
        %393 = vperm.xlu0 %392, %v288
        %v394 = vpop.permute.xlu0 %393
        %vm396 = vcmask 15360
        %v398 = vsel %vm396, %v281, 0
        %v401 = vsel %vm396, %v282, 0
        %v404 = vsel %vm396, %v283, 0
        %v407 = vsel %vm396, %v284, 0
        %vm409 = vcmask 1041408
        %v411 = vsel %vm409, %v375, 0
        %413 = vmatprep.subr.mxu0 0.0
        %414 = vmatpush1.msra.mxu0 0.0
        %415 = vmatprep.subr.mxu0 0.0
        %416 = vmatpush1.msra.mxu0 0.0
        %417 = vmatprep.subr.mxu0 0.0
        %418 = vmatpush1.msra.mxu0 0.0
        %419 = vmatprep.subr.mxu0 0.0
        %420 = vmatpush1.msra.mxu0 0.0
        %421 = vmatprep.subr.mxu0 0.0
        %422 = vmatpush1.msra.mxu0 0.0
        %423 = vmatprep.subr.mxu0 0.0
        %424 = vmatpush1.msra.mxu0 0.0
        %425 = vmatprep.subr.mxu0 0.0
        %426 = vmatpush1.msra.mxu0 0.0
        %427 = vmatprep.subr.mxu0 0.0
        %428 = vmatpush1.msra.mxu0 0.0
        %429 = vmatprep.subr.mxu0 0.0
        %430 = vmatpush1.msra.mxu0 0.0
        %431 = vmatprep.subr.mxu0 0.0
        %432 = vmatpush1.msra.mxu0 0.0
        %433 = vmatprep.subr.mxu0 0.0
        %434 = vmatpush1.msra.mxu0 0.0
        %435 = vmatprep.subr.mxu0 0.0
        %436 = vmatpush1.msra.mxu0 0.0
        %437 = vmatprep.subr.mxu0 0.0
        %438 = vmatpush1.msra.mxu0 0.0
        %439 = vmatprep.subr.mxu0 0.0
        %440 = vmatpush1.msra.mxu0 0.0
        %441 = vmatprep.subr.mxu0 0.0
        %442 = vmatpush1.msra.mxu0 0.0
        %443 = vmatprep.subr.mxu0 0.0
        %444 = vmatpush1.msra.mxu0 %v411
        %445 = vmatprep.subr.mxu0 0.0
        %446 = vmatpush2.msra.mxu0 0.0
        %447 = vmatprep.subr.mxu0 0.0
        %448 = vmatpush2.msra.mxu0 0.0
        %449 = vmatprep.subr.mxu0 0.0
        %450 = vmatpush2.msra.mxu0 0.0
        %451 = vmatprep.subr.mxu0 0.0
        %452 = vmatpush2.msra.mxu0 0.0
        %453 = vmatprep.subr.mxu0 0.0
        %454 = vmatpush2.msra.mxu0 0.0
        %455 = vmatprep.subr.mxu0 0.0
        %456 = vmatpush2.msra.mxu0 0.0
        %457 = vmatprep.subr.mxu0 0.0
        %458 = vmatpush2.msra.mxu0 0.0
        %459 = vmatprep.subr.mxu0 0.0
        %460 = vmatpush2.msra.mxu0 0.0
        %461 = vmatprep.subr.mxu0 0.0
        %462 = vmatpush2.msra.mxu0 0.0
        %463 = vmatprep.subr.mxu0 0.0
        %464 = vmatpush2.msra.mxu0 0.0
        %465 = vmatprep.subr.mxu0 0.0
        %466 = vmatpush2.msra.mxu0 0.0
        %467 = vmatprep.subr.mxu0 0.0
        %468 = vmatpush2.msra.mxu0 0.0
        %469 = vmatprep.subr.mxu0 0.0
        %470 = vmatpush2.msra.mxu0 0.0
        %471 = vmatprep.subr.mxu0 0.0
        %472 = vmatpush2.msra.mxu0 0.0
        %473 = vmatprep.subr.mxu0 0.0
        %474 = vmatpush2.msra.mxu0 0.0
        %475 = vmatprep.subr.mxu0 0.0
        %476 = vmatpush2.msra.mxu0 0.0
        %477 = vmatprep.mubr.f32.mxu0 0.0
        %478 = vmatmul.mubr.f32.gmra.mxu0 %v398
        %v479 = vpop.f32.mrf.mxu0
        %v480 = vadd.f32 %v379, %v479
        %v481 = vpop.f32.mrf.mxu0
        %482 = vmatprep.mubr.f32.mxu0 0.0
        %483 = vmatmul.mubr.f32.gmra.mxu0 %v401
        %v484 = vpop.f32.mrf.mxu0
        %v485 = vadd.f32 %v384, %v484
        %v486 = vpop.f32.mrf.mxu0
        %487 = vmatprep.mubr.f32.mxu0 0.0
        %488 = vmatmul.mubr.f32.gmra.mxu0 %v404
        %v489 = vpop.f32.mrf.mxu0
        %v490 = vadd.f32 %v389, %v489
        %v491 = vpop.f32.mrf.mxu0
        %492 = vmatprep.mubr.f32.mxu0 0.0
        %493 = vmatmul.mubr.f32.gmra.mxu0 %v407
        %v494 = vpop.f32.mrf.mxu0
        %v495 = vadd.f32 %v394, %v494
        %v496 = vpop.f32.mrf.mxu0
        %497 = vdwg.mxu0
        %v498 = vsel %vm396, %v480, 0.0
        %499 = vadd.xlane.f32.xlu0 %v498
        %v500 = vpop.xlane.xlu0 %499
        %v501 = vsel %vm396, %v485, 0.0
        %502 = vadd.xlane.f32.xlu0 %v501
        %v503 = vpop.xlane.xlu0 %502
        %v504 = vsel %vm396, %v490, 0.0
        %505 = vadd.xlane.f32.xlu0 %v504
        %v506 = vpop.xlane.xlu0 %505
        %v507 = vsel %vm396, %v495, 0.0
        %508 = vadd.xlane.f32.xlu0 %v507
        %v509 = vpop.xlane.xlu0 %508
        %v510 = vxor.u32 %v500, 2147483648
        %v511 = vxor.u32 %v503, 2147483648
        %v512 = vxor.u32 %v506, 2147483648
        %v513 = vxor.u32 %v509, 2147483648
        %v514 = vmul.f32 %v510, 1.442695
        %v515 = vpow.pop %v514
        %v516 = vmul.f32 %v511, 1.442695
        %v517 = vpow.pop %v516
        %v518 = vmul.f32 %v512, 1.442695
        %v519 = vpow.pop %v518
        %v520 = vmul.f32 %v513, 1.442695
        %v521 = vpow.pop %v520
        %v522 = vadd.f32 %v515, 1.0
        %v523 = vadd.f32 %v517, 1.0
        %v524 = vadd.f32 %v519, 1.0
        %v525 = vadd.f32 %v521, 1.0
        %v526 = vrcp.pop %v522
        %v527 = vmul.f32 1.0, %v526
        %v528 = vrcp.pop %v523
        %v529 = vmul.f32 1.0, %v528
        %v530 = vrcp.pop %v524
        %v531 = vmul.f32 1.0, %v530
        %v532 = vrcp.pop %v525
        %v533 = vmul.f32 1.0, %v532
        %v534 = vmul.f32 %v243, %v527
        %v535 = vmul.f32 %v244, %v527
        %v536 = vmul.f32 %v245, %v529
        %v537 = vmul.f32 %v246, %v529
        %v538 = vmul.f32 %v247, %v531
        %v539 = vmul.f32 %v248, %v531
        %v540 = vmul.f32 %v249, %v533
        %v541 = vmul.f32 %v250, %v533
        %542 = vst [vmem:[%s242] sm:$0xff] %v534
        %543 = vst [vmem:[%s242 + $0x8] sm:$0xff] %v535
        %544 = vst [vmem:[%s242 + $0x10] sm:$0xff] %v536
        %545 = vst [vmem:[%s242 + $0x18] sm:$0xff] %v537
        %546 = vst [vmem:[%s242 + $0x20] sm:$0xff] %v538
        %547 = vst [vmem:[%s242 + $0x28] sm:$0xff] %v539
        %548 = vst [vmem:[%s242 + $0x30] sm:$0xff] %v540
        %549 = vst [vmem:[%s242 + $0x38] sm:$0xff] %v541
        %s550 = sand.u32 %s140, 1
        %s551 = scalar_lea.sflag [#allocation4], %s550
        %s552 = sand.u32 %s140, 1
        %s553 = smul.addr %s552, 64
        %s554 = scalar_lea.vmem [#allocation5], %s553
        // Predicated region
        $region45: #{tpu_custom_call.1} parent=39 // pred_check
          %p555 = pneg %p150
        $region46: #{tpu_custom_call.1} parent=39 // pred_check_branch
          %557 = sbr.rel (%p555) target = $region48
        $region47: #{tpu_custom_call.1} parent=39 // pred_region
          %s559 = ssub.s32 1024, 1024
          %560 = vsyncadd %s551, %s559
          %s561 = smul.addr %s22, 8
          %s562 = smul.addr %s561, 128
          %s563 = scalar_lea.hbm %s5, %s562
          %s564 = sshll.u32 %s554, 4
          %s565 = int_to_ptr.vmem [resolvable:$true] %s564
          %570 = dma.vmem_to_hbm [thread:$0]  %s565, 1024, %s563, %s551, 256, 256, 16
        $region48: #{tpu_custom_call.1} parent=39 // pred_fallthru
          _
      $region40: #{tpu_custom_call.1} parent=5 // pred_fallthru
        _
      %p571 = scmp.le.s32.totalorder 2, %s17
      // Predicated region
      $region49: #{tpu_custom_call.1} parent=5 // pred_check
        %p572 = pneg %p571
      $region50: #{tpu_custom_call.1} parent=5 // pred_check_branch
        %574 = sbr.rel (%p572) target = $region52
      $region51: #{tpu_custom_call.1} parent=5 // pred_region
        %s575 = ssub.s32 %s17, 2
        // Predicated region
        $region53: #{tpu_custom_call.1} parent=51 // pred_check
          %p576 = pneg %p156
        $region54: #{tpu_custom_call.1} parent=51 // pred_check_branch
          %578 = sbr.rel (%p576) target = $region56
        $region55: #{tpu_custom_call.1} parent=51 // pred_region
          %s579 = sand.u32 %s141, 1
          %s580 = scalar_lea.sflag [#allocation4], %s579
          %s581 = sand.u32 %s141, 1
          %s582 = smul.addr %s581, 64
          %s583 = scalar_lea.vmem [#allocation5], %s582
          %584 = dma.done %s580, 1024
        $region56: #{tpu_custom_call.1} parent=51 // pred_fallthru
          _
      $region52: #{tpu_custom_call.1} parent=5 // pred_fallthru
        _
    $region6: #{tpu_custom_call.1} parent=1 // loop_footer
      %s21 = sadd.s32 1, %s17
    $region7: #{tpu_custom_call.1} parent=1 // loop_footer_branch
      %16 = sbr.rel target = $region3
    $region8: #{tpu_custom_call.1} parent=1 // loop_exit
      _
    %585 = vsyncpa [#allocation3], 1
    %s586 = scalar_lea.sflag [#allocation3], 1
    %587 = vsyncpa %s586, 1
    %588 = vsyncpa [#allocation4], 1
    %s589 = scalar_lea.sflag [#allocation4], 1
    %590 = vsyncpa %s589, 1

// kernel: tpu_custom_call.1
$region0: #{tpu_custom_call.1}
  #allocation0 [shape = 'u32[]', space=smem, size = 0x4, offset = 0x4, fixed_abs, tag = 'smem constant byte address 0x4 - core index']
  #allocation1 [shape = 'u32[144,128]{1,0:T(1,128)}', space=vmem, size = 0x12000, scoped, tag = 'internal scratch']
  #allocation2 [shape = 'f32[32,1]{1,0:T(8,128)}', space=vmem, size = 0x4000, scoped, tag = 'scratch operand']
  #allocation3 [shape = 'f32[32,1]{1,0:T(8,128)}', space=vmem, size = 0x4000, scoped, tag = 'scratch operand']
  %s0 = inlined_call_operand.hbm [shape: f32[2,32,256], index: 0, kind: input, shape index: {}]
  %s1 = inlined_call_operand.vmem [shape: f32[2,32], index: 1, kind: input, shape index: {}]
  %s2 = inlined_call_operand.vmem [shape: f32[2,1], index: 2, kind: input, shape index: {}]
  %s3 = inlined_call_operand.vmem [shape: f32[32,2], index: 3, kind: input, shape index: {}]
  %s4 = inlined_call_operand.vmem [shape: f32[32,1], index: 4, kind: input, shape index: {}]
  %s5 = inlined_call_operand.vmem [shape: f32[2,32,1], index: 5, kind: output, shape index: {}]
  %s6 = sld [smem:[#allocation0]]
  $region65: #{tpu_custom_call.1} parent=0
    _
  %s8 = ssub.s32 1, %s6
  %s9 = scalar_select 0, %s8, %s6
  $region1: #{tpu_custom_call.1} parent=0
    #allocation4 [shape = 'u8[65536]{0}', space=vmem, size = 0x10000, scoped, tag = 'input window, operand 0']
    #allocation5 [shape = 's32[2]{0}', space=sflag, size = 0x8, scoped, tag = 'scoped memory for tpu_custom_call.1']
    %10 = vsyncpa [#allocation5], 0
    %s11 = scalar_lea.sflag [#allocation5], 1
    %12 = vsyncpa %s11, 0
    loop: start=0, step=1, limit=4
    $region2: #{tpu_custom_call.1} parent=1 // loop_pre_header
      _
    $region3: #{tpu_custom_call.1} parent=1 // loop_header
      %s14 = sphi 0, %s18
      %p15 = scmp.ge.s32.totalorder %s14, 4
      %s21 = sphi 0, %s33
      %s22 = sphi 0, %s29
      %s23 = sphi 0, %s21
      %s24 = sphi 0, %s22
      %s25 = sphi 0, %s23
      %s26 = sphi 0, %s24
      %s38 = sphi 0, %s40
      %s41 = sphi 0, %s38
      %s42 = sphi 0, %s41
      %s58 = sphi 0, %s42
      %s62 = sphi 0, %s62
      %s64 = sphi 0, %s62
      %s65 = sphi 0, %s64
      %s79 = sphi 0, %s65
      %s83 = sphi 0, %s83
      %s85 = sphi 0, %s83
      %s86 = sphi 0, %s85
      %s100 = sphi 0, %s86
      %s104 = sphi 0, %s104
      %s106 = sphi 0, %s104
      %s107 = sphi 0, %s106
      %s121 = sphi 0, %s107
      %s125 = sphi 0, %s125
      %s127 = sphi 0, %s125
      %s128 = sphi 0, %s127
      %s142 = sphi 0, %s128
      %s148 = sphi 0, %s150
      %s151 = sphi 0, %s148
      %s152 = sphi 0, %s151
      %s168 = sphi 0, %s152
    $region4: #{tpu_custom_call.1} parent=1 // loop_header_branch
      %17 = sbr.rel (%p15) target = $region8
    $region5: #{tpu_custom_call.1} parent=1 // loop_body
      %s19 = ssub.s32 %s14, 1
      %s20 = ssub.s32 %s14, 2
      %s27 = sadd.s32 1, %s22
      %p28 = scmp.ge.s32.totalorder %s27, 1
      %s29 = scalar_select %p28, 0, %s27
      %s30 = sadd.s32 1, %s21
      %s31 = scalar_select %p28, %s30, %s21
      %p32 = scmp.ge.s32.totalorder %s31, 2
      %s33 = scalar_select %p32, 0, %s31
      %s34 = ssub.s32 %s21, %s33
      %s35 = ssub.s32 %s22, %s29
      %s36 = sor.u32 %s34, %s35
      %p37 = scmp.eq.s32.totalorder %s36, 0
      %s39 = sadd.s32 %s38, 1
      %s40 = scalar_select %p37, %s38, %s39
      %p43 = pneg %p37
      %p44 = scmp.eq.s32.totalorder %s14, 1
      %p45 = por %p43, %p44
      %p46 = scmp.ne.s32.totalorder %s38, %s41
      %p47 = scmp.eq.s32.totalorder %s14, 0
      %p48 = por %p46, %p47
      %p49 = scmp.ne.s32.totalorder %s38, %s41
      %p50 = scmp.eq.s32.totalorder %s19, 1
      %p51 = por %p49, %p50
      %p52 = scmp.ne.s32.totalorder %s41, %s42
      %p53 = scmp.eq.s32.totalorder %s19, 0
      %p54 = por %p52, %p53
      %p55 = scmp.ne.s32.totalorder %s41, %s42
      %p56 = scmp.eq.s32.totalorder %s20, 1
      %p57 = por %p55, %p56
      %p59 = scmp.ne.s32.totalorder %s42, %s58
      %p60 = scmp.eq.s32.totalorder %s20, 0
      %p61 = por %p59, %p60
      %s63 = sadd.s32 %s62, 1
      %p66 = scmp.eq.s32.totalorder %s14, 1
      %p67 = scmp.ne.s32.totalorder %s62, %s64
      %p68 = scmp.eq.s32.totalorder %s14, 0
      %p69 = por %p67, %p68
      %p70 = scmp.ne.s32.totalorder %s62, %s64
      %p71 = scmp.eq.s32.totalorder %s19, 1
      %p72 = por %p70, %p71
      %p73 = scmp.ne.s32.totalorder %s64, %s65
      %p74 = scmp.eq.s32.totalorder %s19, 0
      %p75 = por %p73, %p74
      %p76 = scmp.ne.s32.totalorder %s64, %s65
      %p77 = scmp.eq.s32.totalorder %s20, 1
      %p78 = por %p76, %p77
      %p80 = scmp.ne.s32.totalorder %s65, %s79
      %p81 = scmp.eq.s32.totalorder %s20, 0
      %p82 = por %p80, %p81
      %s84 = sadd.s32 %s83, 1
      %p87 = scmp.eq.s32.totalorder %s14, 1
      %p88 = scmp.ne.s32.totalorder %s83, %s85
      %p89 = scmp.eq.s32.totalorder %s14, 0
      %p90 = por %p88, %p89
      %p91 = scmp.ne.s32.totalorder %s83, %s85
      %p92 = scmp.eq.s32.totalorder %s19, 1
      %p93 = por %p91, %p92
      %p94 = scmp.ne.s32.totalorder %s85, %s86
      %p95 = scmp.eq.s32.totalorder %s19, 0
      %p96 = por %p94, %p95
      %p97 = scmp.ne.s32.totalorder %s85, %s86
      %p98 = scmp.eq.s32.totalorder %s20, 1
      %p99 = por %p97, %p98
      %p101 = scmp.ne.s32.totalorder %s86, %s100
      %p102 = scmp.eq.s32.totalorder %s20, 0
      %p103 = por %p101, %p102
      %s105 = sadd.s32 %s104, 1
      %p108 = scmp.eq.s32.totalorder %s14, 1
      %p109 = scmp.ne.s32.totalorder %s104, %s106
      %p110 = scmp.eq.s32.totalorder %s14, 0
      %p111 = por %p109, %p110
      %p112 = scmp.ne.s32.totalorder %s104, %s106
      %p113 = scmp.eq.s32.totalorder %s19, 1
      %p114 = por %p112, %p113
      %p115 = scmp.ne.s32.totalorder %s106, %s107
      %p116 = scmp.eq.s32.totalorder %s19, 0
      %p117 = por %p115, %p116
      %p118 = scmp.ne.s32.totalorder %s106, %s107
      %p119 = scmp.eq.s32.totalorder %s20, 1
      %p120 = por %p118, %p119
      %p122 = scmp.ne.s32.totalorder %s107, %s121
      %p123 = scmp.eq.s32.totalorder %s20, 0
      %p124 = por %p122, %p123
      %s126 = sadd.s32 %s125, 1
      %p129 = scmp.eq.s32.totalorder %s14, 1
      %p130 = scmp.ne.s32.totalorder %s125, %s127
      %p131 = scmp.eq.s32.totalorder %s14, 0
      %p132 = por %p130, %p131
      %p133 = scmp.ne.s32.totalorder %s125, %s127
      %p134 = scmp.eq.s32.totalorder %s19, 1
      %p135 = por %p133, %p134
      %p136 = scmp.ne.s32.totalorder %s127, %s128
      %p137 = scmp.eq.s32.totalorder %s19, 0
      %p138 = por %p136, %p137
      %p139 = scmp.ne.s32.totalorder %s127, %s128
      %p140 = scmp.eq.s32.totalorder %s20, 1
      %p141 = por %p139, %p140
      %p143 = scmp.ne.s32.totalorder %s128, %s142
      %p144 = scmp.eq.s32.totalorder %s20, 0
      %p145 = por %p143, %p144
      %s146 = ssub.s32 %s21, %s33
      %p147 = scmp.eq.s32.totalorder %s146, 0
      %s149 = sadd.s32 %s148, 1
      %s150 = scalar_select %p147, %s148, %s149
      %p153 = pneg %p147
      %p154 = scmp.eq.s32.totalorder %s14, 1
      %p155 = por %p153, %p154
      %p156 = scmp.ne.s32.totalorder %s148, %s151
      %p157 = scmp.eq.s32.totalorder %s14, 0
      %p158 = por %p156, %p157
      %p159 = scmp.ne.s32.totalorder %s148, %s151
      %p160 = scmp.eq.s32.totalorder %s19, 1
      %p161 = por %p159, %p160
      %p162 = scmp.ne.s32.totalorder %s151, %s152
      %p163 = scmp.eq.s32.totalorder %s19, 0
      %p164 = por %p162, %p163
      %p165 = scmp.ne.s32.totalorder %s151, %s152
      %p166 = scmp.eq.s32.totalorder %s20, 1
      %p167 = por %p165, %p166
      %p169 = scmp.ne.s32.totalorder %s152, %s168
      %p170 = scmp.eq.s32.totalorder %s20, 0
      %p171 = por %p169, %p170
      %p172 = scmp.le.s32.totalorder 1, %s14
      %p173 = scmp.lt.s32.totalorder %s14, 3
      %p174 = pnand %p172, %p173
      %p175 = pneg %p174
      // Predicated region
      $region9: #{tpu_custom_call.1} parent=5 // pred_check
        _
      $region10: #{tpu_custom_call.1} parent=5 // pred_check_branch
        %177 = sbr.rel (%p174) target = $region12
      $region11: #{tpu_custom_call.1} parent=5 // pred_region
        %s178 = ssub.s32 %s14, 1
        // Predicated region
        $region13: #{tpu_custom_call.1} parent=11 // pred_check
          %p179 = pneg %p75
        $region14: #{tpu_custom_call.1} parent=11 // pred_check_branch
          %181 = sbr.rel (%p179) target = $region16
        $region15: #{tpu_custom_call.1} parent=11 // pred_region
          _
        $region16: #{tpu_custom_call.1} parent=11 // pred_fallthru
          _
        // Predicated region
        $region17: #{tpu_custom_call.1} parent=11 // pred_check
          %p182 = pneg %p96
        $region18: #{tpu_custom_call.1} parent=11 // pred_check_branch
          %184 = sbr.rel (%p182) target = $region20
        $region19: #{tpu_custom_call.1} parent=11 // pred_region
          _
        $region20: #{tpu_custom_call.1} parent=11 // pred_fallthru
          _
        // Predicated region
        $region21: #{tpu_custom_call.1} parent=11 // pred_check
          %p185 = pneg %p117
        $region22: #{tpu_custom_call.1} parent=11 // pred_check_branch
          %187 = sbr.rel (%p185) target = $region24
        $region23: #{tpu_custom_call.1} parent=11 // pred_region
          _
        $region24: #{tpu_custom_call.1} parent=11 // pred_fallthru
          _
        // Predicated region
        $region25: #{tpu_custom_call.1} parent=11 // pred_check
          %p188 = pneg %p138
        $region26: #{tpu_custom_call.1} parent=11 // pred_check_branch
          %190 = sbr.rel (%p188) target = $region28
        $region27: #{tpu_custom_call.1} parent=11 // pred_region
          _
        $region28: #{tpu_custom_call.1} parent=11 // pred_fallthru
          _
      $region12: #{tpu_custom_call.1} parent=5 // pred_fallthru
        _
      %p191 = scmp.lt.s32.totalorder %s14, 2
      // Predicated region
      $region29: #{tpu_custom_call.1} parent=5 // pred_check
        %p192 = pneg %p191
      $region30: #{tpu_custom_call.1} parent=5 // pred_check_branch
        %194 = sbr.rel (%p192) target = $region32
      $region31: #{tpu_custom_call.1} parent=5 // pred_region
        // Predicated region
        $region33: #{tpu_custom_call.1} parent=31 // pred_check
          %p195 = pneg %p48
        $region34: #{tpu_custom_call.1} parent=31 // pred_check_branch
          %197 = sbr.rel (%p195) target = $region36
        $region35: #{tpu_custom_call.1} parent=31 // pred_region
          %s198 = sand.u32 %s38, 1
          %s199 = scalar_lea.sflag [#allocation5], %s198
          %s200 = sand.u32 %s38, 1
          %s201 = smul.addr %s200, 64
          %s202 = scalar_lea.vmem [#allocation4], %s201
          %s203 = smul.u32 2, %s22
          %s205 = ssub.s32 1024, 1024
          %206 = vsyncadd %s199, %s205
          %s207 = smul.addr %s21, 8
          %s208 = sadd.s32 %s203, %s207
          %s209 = smul.addr %s208, 128
          %s210 = scalar_lea.hbm %s0, %s209
          %s211 = sshll.u32 %s202, 4
          %s212 = int_to_ptr.vmem [resolvable:$true] %s211
          %217 = dma.hbm_to_vmem [thread:$0]  %s210, 1024, %s212, %s199, 256, 256, 16
        $region36: #{tpu_custom_call.1} parent=31 // pred_fallthru
          _
      $region32: #{tpu_custom_call.1} parent=5 // pred_fallthru
        _
      %p218 = scmp.le.s32.totalorder 1, %s14
      %p219 = scmp.lt.s32.totalorder %s14, 3
      %p220 = pnand %p218, %p219
      %p221 = pneg %p220
      // Predicated region
      $region37: #{tpu_custom_call.1} parent=5 // pred_check
        _
      $region38: #{tpu_custom_call.1} parent=5 // pred_check_branch
        %223 = sbr.rel (%p220) target = $region40
      $region39: #{tpu_custom_call.1} parent=5 // pred_region
        %s224 = ssub.s32 %s14, 1
        %s225 = sand.u32 %s41, 1
        %s226 = scalar_lea.sflag [#allocation5], %s225
        %s227 = sand.u32 %s41, 1
        %s228 = smul.addr %s227, 64
        %s229 = scalar_lea.vmem [#allocation4], %s228
        // Predicated region
        $region41: #{tpu_custom_call.1} parent=39 // pred_check
          %p230 = pneg %p54
        $region42: #{tpu_custom_call.1} parent=39 // pred_check_branch
          %232 = sbr.rel (%p230) target = $region44
        $region43: #{tpu_custom_call.1} parent=39 // pred_region
          %233 = dma.done %s226, 1024
        $region44: #{tpu_custom_call.1} parent=39 // pred_fallthru
          _
        %s234 = sand.u32 %s41, 1
        %s235 = scalar_lea.sflag [#allocation5], %s234
        %s236 = sand.u32 %s41, 1
        %s237 = smul.addr %s236, 64
        %s238 = scalar_lea.vmem [#allocation4], %s237
        %p239 = pneg %p54
        %p240 = pneg %p51
        %p241 = pneg %p75
        %p242 = pneg %p72
        %p243 = pneg %p96
        %p244 = pneg %p93
        %p245 = pneg %p117
        %p246 = pneg %p114
        %p247 = pneg %p138
        %p248 = pneg %p135
        %p249 = pneg %p164
        %p250 = pneg %p161
        %p251 = scmp.lt.s32.totalorder %s23, 1
        %s252 = scalar_select %p251, %s23, 1
        %s253 = smul.addr %s252, 4
        %s254 = smul.addr %s253, 8
        %s255 = scalar_lea.vmem %s5, %s254
        %s256 = smul.u32 2, %s24
        %p257 = scmp.lt.s32.totalorder %s23, 1
        %s258 = scalar_select %p257, %s23, 1
        %s259 = smul.addr %s258, 4
        %s260 = smul.addr %s259, 8
        %s261 = scalar_lea.vmem %s5, %s260
        %p262 = scmp.eq.s32.totalorder %s24, 0
        // Predicated region
        $region45: #{tpu_custom_call.1} parent=39 // pred_check
          %p263 = pneg %p262
        $region46: #{tpu_custom_call.1} parent=39 // pred_check_branch
          %265 = sbr.rel (%p263) target = $region48
        $region47: #{tpu_custom_call.1} parent=39 // pred_region
          %vm266 = vcmask 7168
          %267 = vst.msk [vmem:[#allocation2] sm:$0xff] %vm266, 0.0
          %268 = vst.msk [vmem:[#allocation2 + $0x8] sm:$0xff] %vm266, 0.0
          %269 = vst.msk [vmem:[#allocation2 + $0x10] sm:$0xff] %vm266, 0.0
          %270 = vst.msk [vmem:[#allocation2 + $0x18] sm:$0xff] %vm266, 0.0
          %271 = vst.msk [vmem:[#allocation3] sm:$0xff] %vm266, -inf
          %272 = vst.msk [vmem:[#allocation3 + $0x8] sm:$0xff] %vm266, -inf
          %273 = vst.msk [vmem:[#allocation3 + $0x10] sm:$0xff] %vm266, -inf
          %274 = vst.msk [vmem:[#allocation3 + $0x18] sm:$0xff] %vm266, -inf
        $region48: #{tpu_custom_call.1} parent=39 // pred_fallthru
          _
        %v275 = vld [vmem:[%s229] sm:$0xff]
        %v276 = vld [vmem:[%s229 + $0x8] sm:$0xff]
        %v277 = vld [vmem:[%s229 + $0x10] sm:$0xff]
        %v278 = vld [vmem:[%s229 + $0x18] sm:$0xff]
        %v279 = vld [vmem:[%s229 + $0x20] sm:$0xff]
        %v280 = vld [vmem:[%s229 + $0x28] sm:$0xff]
        %v281 = vld [vmem:[%s229 + $0x30] sm:$0xff]
        %v282 = vld [vmem:[%s229 + $0x38] sm:$0xff]
        %v283 = vld [vmem:[#allocation2] sm:$0xff]
        %v284 = vld [vmem:[#allocation2 + $0x8] sm:$0xff]
        %v285 = vld [vmem:[#allocation2 + $0x10] sm:$0xff]
        %v286 = vld [vmem:[#allocation2 + $0x18] sm:$0xff]
        %v287 = vadd.f32 %v275, %v276
        %288 = vadd.xlane.f32.xlu0 %v287
        %v289 = vpop.xlane.xlu0 %288
        %v290 = vadd.f32 %v277, %v278
        %291 = vadd.xlane.f32.xlu0 %v290
        %v292 = vpop.xlane.xlu0 %291
        %v293 = vadd.f32 %v279, %v280
        %294 = vadd.xlane.f32.xlu0 %v293
        %v295 = vpop.xlane.xlu0 %294
        %v296 = vadd.f32 %v281, %v282
        %297 = vadd.xlane.f32.xlu0 %v296
        %v298 = vpop.xlane.xlu0 %297
        %v299 = vadd.f32 %v283, %v289
        %v300 = vadd.f32 %v284, %v292
        %v301 = vadd.f32 %v285, %v295
        %v302 = vadd.f32 %v286, %v298
        %vm303 = vcmask 7168
        %304 = vst.msk [vmem:[#allocation2] sm:$0xff] %vm303, %v299
        %305 = vst.msk [vmem:[#allocation2 + $0x8] sm:$0xff] %vm303, %v300
        %306 = vst.msk [vmem:[#allocation2 + $0x10] sm:$0xff] %vm303, %v301
        %307 = vst.msk [vmem:[#allocation2 + $0x18] sm:$0xff] %vm303, %v302
        %v308 = vld [vmem:[#allocation3] sm:$0xff]
        %v309 = vld [vmem:[#allocation3 + $0x8] sm:$0xff]
        %v310 = vld [vmem:[#allocation3 + $0x10] sm:$0xff]
        %v311 = vld [vmem:[#allocation3 + $0x18] sm:$0xff]
        %v312 = vmax.f32 %v275, %v276
        %313 = vmax.xlane.f32.xlu0 %v312
        %v314 = vpop.xlane.xlu0 %313
        %v315 = vmax.f32 %v277, %v278
        %316 = vmax.xlane.f32.xlu0 %v315
        %v317 = vpop.xlane.xlu0 %316
        %v318 = vmax.f32 %v279, %v280
        %319 = vmax.xlane.f32.xlu0 %v318
        %v320 = vpop.xlane.xlu0 %319
        %v321 = vmax.f32 %v281, %v282
        %322 = vmax.xlane.f32.xlu0 %v321
        %v323 = vpop.xlane.xlu0 %322
        %v324 = vmax.f32 %v308, %v314
        %v325 = vmax.f32 %v309, %v317
        %v326 = vmax.f32 %v310, %v320
        %v327 = vmax.f32 %v311, %v323
        %328 = vst.msk [vmem:[#allocation3] sm:$0xff] %vm303, %v324
        %329 = vst.msk [vmem:[#allocation3 + $0x8] sm:$0xff] %vm303, %v325
        %330 = vst.msk [vmem:[#allocation3 + $0x10] sm:$0xff] %vm303, %v326
        %331 = vst.msk [vmem:[#allocation3 + $0x18] sm:$0xff] %vm303, %v327
        // Predicated region
        $region49: #{tpu_custom_call.1} parent=39 // pred_check
          %p332 = pneg %p262
        $region50: #{tpu_custom_call.1} parent=39 // pred_check_branch
          %334 = sbr.rel (%p332) target = $region52
        $region51: #{tpu_custom_call.1} parent=39 // pred_region
          %v335 = vld [vmem:[#allocation2] sm:$0xff]
          %v336 = vld [vmem:[#allocation2 + $0x8] sm:$0xff]
          %v337 = vld [vmem:[#allocation2 + $0x10] sm:$0xff]
          %v338 = vld [vmem:[#allocation2 + $0x18] sm:$0xff]
          %v339 = vmul.f32 %v335, 0.00390625
          %v340 = vmul.f32 %v336, 0.00390625
          %v341 = vmul.f32 %v337, 0.00390625
          %v342 = vmul.f32 %v338, 0.00390625
          %v343 = vld [vmem:[#allocation3] sm:$0xff]
          %v344 = vld [vmem:[#allocation3 + $0x8] sm:$0xff]
          %v345 = vld [vmem:[#allocation3 + $0x10] sm:$0xff]
          %v346 = vld [vmem:[#allocation3 + $0x18] sm:$0xff]
          %v347 = vld [vmem:[%s1] sm:$0x3]
          %v348 = vld [vmem:[%s2] sm:$0x3]
          %v349 = vld [vmem:[%s3] sm:$0xff]
          %v350 = vld [vmem:[%s3 + $0x8] sm:$0xff]
          %v351 = vld [vmem:[%s3 + $0x10] sm:$0xff]
          %v352 = vld [vmem:[%s3 + $0x18] sm:$0xff]
          %v353 = vld [vmem:[%s4] sm:$0xff]
          %v354 = vld [vmem:[%s4 + $0x8] sm:$0xff]
          %v355 = vld [vmem:[%s4 + $0x10] sm:$0xff]
          %v356 = vld [vmem:[%s4 + $0x18] sm:$0xff]
          %v357 = vlaneseq
          %v358 = vand.u32 %v357, 127
          %vm359 = vcmp.eq.s32.totalorder %v358, 0
          %361 = vset.pattern.permute.xlu0 0
          %362 = vperm.xlu0 %361, %v339
          %v363 = vpop.permute.xlu0 %362
          %366 = vset.pattern.permute.xlu0 0
          %367 = vperm.xlu0 %366, %v340
          %v368 = vpop.permute.xlu0 %367
          %371 = vset.pattern.permute.xlu0 0
          %372 = vperm.xlu0 %371, %v341
          %v373 = vpop.permute.xlu0 %372
          %376 = vset.pattern.permute.xlu0 0
          %377 = vperm.xlu0 %376, %v342
          %v378 = vpop.permute.xlu0 %377
          %381 = vset.pattern.permute.xlu0 0
          %382 = vperm.xlu0 %381, %v343
          %v383 = vpop.permute.xlu0 %382
          %386 = vset.pattern.permute.xlu0 0
          %387 = vperm.xlu0 %386, %v344
          %v388 = vpop.permute.xlu0 %387
          %391 = vset.pattern.permute.xlu0 0
          %392 = vperm.xlu0 %391, %v345
          %v393 = vpop.permute.xlu0 %392
          %396 = vset.pattern.permute.xlu0 0
          %397 = vperm.xlu0 %396, %v346
          %v398 = vpop.permute.xlu0 %397
          %v400 = vsel %vm359, %v363, %v383
          %v401 = vsel %vm359, %v368, %v388
          %v402 = vsel %vm359, %v373, %v393
          %v403 = vsel %vm359, %v378, %v398
          %405 = vset.pattern.permute.xlu0 0
          %406 = vperm.xlu0 %405, %v348
          %v407 = vpop.permute.xlu0 %406
          %vm409 = vcmask 261120
          %v411 = vsel %vm409, %v347, 0
          %413 = vmatprep.subr.mxu0 0.0
          %414 = vmatpush1.msra.mxu0 0.0
          %415 = vmatprep.subr.mxu0 0.0
          %416 = vmatpush1.msra.mxu0 0.0
          %417 = vmatprep.subr.mxu0 0.0
          %418 = vmatpush1.msra.mxu0 0.0
          %419 = vmatprep.subr.mxu0 0.0
          %420 = vmatpush1.msra.mxu0 0.0
          %421 = vmatprep.subr.mxu0 0.0
          %422 = vmatpush1.msra.mxu0 0.0
          %423 = vmatprep.subr.mxu0 0.0
          %424 = vmatpush1.msra.mxu0 0.0
          %425 = vmatprep.subr.mxu0 0.0
          %426 = vmatpush1.msra.mxu0 0.0
          %427 = vmatprep.subr.mxu0 0.0
          %428 = vmatpush1.msra.mxu0 0.0
          %429 = vmatprep.subr.mxu0 0.0
          %430 = vmatpush1.msra.mxu0 0.0
          %431 = vmatprep.subr.mxu0 0.0
          %432 = vmatpush1.msra.mxu0 0.0
          %433 = vmatprep.subr.mxu0 0.0
          %434 = vmatpush1.msra.mxu0 0.0
          %435 = vmatprep.subr.mxu0 0.0
          %436 = vmatpush1.msra.mxu0 0.0
          %437 = vmatprep.subr.mxu0 0.0
          %438 = vmatpush1.msra.mxu0 %v403
          %439 = vmatprep.subr.mxu0 0.0
          %440 = vmatpush1.msra.mxu0 %v402
          %441 = vmatprep.subr.mxu0 0.0
          %442 = vmatpush1.msra.mxu0 %v401
          %443 = vmatprep.subr.mxu0 0.0
          %444 = vmatpush1.msra.mxu0 %v400
          %445 = vmatprep.subr.mxu0 0.0
          %446 = vmatpush2.msra.mxu0 0.0
          %447 = vmatprep.subr.mxu0 0.0
          %448 = vmatpush2.msra.mxu0 0.0
          %449 = vmatprep.subr.mxu0 0.0
          %450 = vmatpush2.msra.mxu0 0.0
          %451 = vmatprep.subr.mxu0 0.0
          %452 = vmatpush2.msra.mxu0 0.0
          %453 = vmatprep.subr.mxu0 0.0
          %454 = vmatpush2.msra.mxu0 0.0
          %455 = vmatprep.subr.mxu0 0.0
          %456 = vmatpush2.msra.mxu0 0.0
          %457 = vmatprep.subr.mxu0 0.0
          %458 = vmatpush2.msra.mxu0 0.0
          %459 = vmatprep.subr.mxu0 0.0
          %460 = vmatpush2.msra.mxu0 0.0
          %461 = vmatprep.subr.mxu0 0.0
          %462 = vmatpush2.msra.mxu0 0.0
          %463 = vmatprep.subr.mxu0 0.0
          %464 = vmatpush2.msra.mxu0 0.0
          %465 = vmatprep.subr.mxu0 0.0
          %466 = vmatpush2.msra.mxu0 0.0
          %467 = vmatprep.subr.mxu0 0.0
          %468 = vmatpush2.msra.mxu0 0.0
          %469 = vmatprep.subr.mxu0 0.0
          %470 = vmatpush2.msra.mxu0 0.0
          %471 = vmatprep.subr.mxu0 0.0
          %472 = vmatpush2.msra.mxu0 0.0
          %473 = vmatprep.subr.mxu0 0.0
          %474 = vmatpush2.msra.mxu0 0.0
          %475 = vmatprep.subr.mxu0 0.0
          %476 = vmatpush2.msra.mxu0 0.0
          %477 = vmatprep.mubr.f32.mxu0 0.0
          %478 = vmatmul.mubr.f32.gmra.mxu0 %v411
          %v479 = vpop.f32.mrf.mxu0
          %v480 = vadd.f32 %v407, %v479
          %v481 = vpop.f32.mrf.mxu0
          %482 = vdwg.mxu0
          %v483 = vmax.f32 %v480, 0.0
          %485 = vset.pattern.permute.xlu0 0
          %486 = vperm.xlu0 %485, %v353
          %v487 = vpop.permute.xlu0 %486
          %490 = vset.pattern.permute.xlu0 0
          %491 = vperm.xlu0 %490, %v354
          %v492 = vpop.permute.xlu0 %491
          %495 = vset.pattern.permute.xlu0 0
          %496 = vperm.xlu0 %495, %v355
          %v497 = vpop.permute.xlu0 %496
          %500 = vset.pattern.permute.xlu0 0
          %501 = vperm.xlu0 %500, %v356
          %v502 = vpop.permute.xlu0 %501
          %vm504 = vcmask 15360
          %v506 = vsel %vm504, %v349, 0
          %v509 = vsel %vm504, %v350, 0
          %v512 = vsel %vm504, %v351, 0
          %v515 = vsel %vm504, %v352, 0
          %vm517 = vcmask 1041408
          %v519 = vsel %vm517, %v483, 0
          %521 = vmatprep.subr.mxu0 0.0
          %522 = vmatpush1.msra.mxu0 0.0
          %523 = vmatprep.subr.mxu0 0.0
          %524 = vmatpush1.msra.mxu0 0.0
          %525 = vmatprep.subr.mxu0 0.0
          %526 = vmatpush1.msra.mxu0 0.0
          %527 = vmatprep.subr.mxu0 0.0
          %528 = vmatpush1.msra.mxu0 0.0
          %529 = vmatprep.subr.mxu0 0.0
          %530 = vmatpush1.msra.mxu0 0.0
          %531 = vmatprep.subr.mxu0 0.0
          %532 = vmatpush1.msra.mxu0 0.0
          %533 = vmatprep.subr.mxu0 0.0
          %534 = vmatpush1.msra.mxu0 0.0
          %535 = vmatprep.subr.mxu0 0.0
          %536 = vmatpush1.msra.mxu0 0.0
          %537 = vmatprep.subr.mxu0 0.0
          %538 = vmatpush1.msra.mxu0 0.0
          %539 = vmatprep.subr.mxu0 0.0
          %540 = vmatpush1.msra.mxu0 0.0
          %541 = vmatprep.subr.mxu0 0.0
          %542 = vmatpush1.msra.mxu0 0.0
          %543 = vmatprep.subr.mxu0 0.0
          %544 = vmatpush1.msra.mxu0 0.0
          %545 = vmatprep.subr.mxu0 0.0
          %546 = vmatpush1.msra.mxu0 0.0
          %547 = vmatprep.subr.mxu0 0.0
          %548 = vmatpush1.msra.mxu0 0.0
          %549 = vmatprep.subr.mxu0 0.0
          %550 = vmatpush1.msra.mxu0 0.0
          %551 = vmatprep.subr.mxu0 0.0
          %552 = vmatpush1.msra.mxu0 %v519
          %553 = vmatprep.subr.mxu0 0.0
          %554 = vmatpush2.msra.mxu0 0.0
          %555 = vmatprep.subr.mxu0 0.0
          %556 = vmatpush2.msra.mxu0 0.0
          %557 = vmatprep.subr.mxu0 0.0
          %558 = vmatpush2.msra.mxu0 0.0
          %559 = vmatprep.subr.mxu0 0.0
          %560 = vmatpush2.msra.mxu0 0.0
          %561 = vmatprep.subr.mxu0 0.0
          %562 = vmatpush2.msra.mxu0 0.0
          %563 = vmatprep.subr.mxu0 0.0
          %564 = vmatpush2.msra.mxu0 0.0
          %565 = vmatprep.subr.mxu0 0.0
          %566 = vmatpush2.msra.mxu0 0.0
          %567 = vmatprep.subr.mxu0 0.0
          %568 = vmatpush2.msra.mxu0 0.0
          %569 = vmatprep.subr.mxu0 0.0
          %570 = vmatpush2.msra.mxu0 0.0
          %571 = vmatprep.subr.mxu0 0.0
          %572 = vmatpush2.msra.mxu0 0.0
          %573 = vmatprep.subr.mxu0 0.0
          %574 = vmatpush2.msra.mxu0 0.0
          %575 = vmatprep.subr.mxu0 0.0
          %576 = vmatpush2.msra.mxu0 0.0
          %577 = vmatprep.subr.mxu0 0.0
          %578 = vmatpush2.msra.mxu0 0.0
          %579 = vmatprep.subr.mxu0 0.0
          %580 = vmatpush2.msra.mxu0 0.0
          %581 = vmatprep.subr.mxu0 0.0
          %582 = vmatpush2.msra.mxu0 0.0
          %583 = vmatprep.subr.mxu0 0.0
          %584 = vmatpush2.msra.mxu0 0.0
          %585 = vmatprep.mubr.f32.mxu0 0.0
          %586 = vmatmul.mubr.f32.gmra.mxu0 %v506
          %v587 = vpop.f32.mrf.mxu0
          %v588 = vadd.f32 %v487, %v587
          %v589 = vpop.f32.mrf.mxu0
          %590 = vmatprep.mubr.f32.mxu0 0.0
          %591 = vmatmul.mubr.f32.gmra.mxu0 %v509
          %v592 = vpop.f32.mrf.mxu0
          %v593 = vadd.f32 %v492, %v592
          %v594 = vpop.f32.mrf.mxu0
          %595 = vmatprep.mubr.f32.mxu0 0.0
          %596 = vmatmul.mubr.f32.gmra.mxu0 %v512
          %v597 = vpop.f32.mrf.mxu0
          %v598 = vadd.f32 %v497, %v597
          %v599 = vpop.f32.mrf.mxu0
          %600 = vmatprep.mubr.f32.mxu0 0.0
          %601 = vmatmul.mubr.f32.gmra.mxu0 %v515
          %v602 = vpop.f32.mrf.mxu0
          %v603 = vadd.f32 %v502, %v602
          %v604 = vpop.f32.mrf.mxu0
          %605 = vdwg.mxu0
          %v606 = vsel %vm504, %v588, 0.0
          %607 = vadd.xlane.f32.xlu0 %v606
          %v608 = vpop.xlane.xlu0 %607
          %v609 = vsel %vm504, %v593, 0.0
          %610 = vadd.xlane.f32.xlu0 %v609
          %v611 = vpop.xlane.xlu0 %610
          %v612 = vsel %vm504, %v598, 0.0
          %613 = vadd.xlane.f32.xlu0 %v612
          %v614 = vpop.xlane.xlu0 %613
          %v615 = vsel %vm504, %v603, 0.0
          %616 = vadd.xlane.f32.xlu0 %v615
          %v617 = vpop.xlane.xlu0 %616
          %v618 = vxor.u32 %v608, 2147483648
          %v619 = vxor.u32 %v611, 2147483648
          %v620 = vxor.u32 %v614, 2147483648
          %v621 = vxor.u32 %v617, 2147483648
          %v622 = vmul.f32 %v618, 1.442695
          %v623 = vpow.pop %v622
          %v624 = vmul.f32 %v619, 1.442695
          %v625 = vpow.pop %v624
          %v626 = vmul.f32 %v620, 1.442695
          %v627 = vpow.pop %v626
          %v628 = vmul.f32 %v621, 1.442695
          %v629 = vpow.pop %v628
          %v630 = vadd.f32 %v623, 1.0
          %v631 = vadd.f32 %v625, 1.0
          %v632 = vadd.f32 %v627, 1.0
          %v633 = vadd.f32 %v629, 1.0
          %v634 = vrcp.pop %v630
          %v635 = vmul.f32 1.0, %v634
          %v636 = vrcp.pop %v631
          %v637 = vmul.f32 1.0, %v636
          %v638 = vrcp.pop %v632
          %v639 = vmul.f32 1.0, %v638
          %v640 = vrcp.pop %v633
          %v641 = vmul.f32 1.0, %v640
          %642 = vst.msk [vmem:[%s261] sm:$0xff] %vm303, %v635
          %643 = vst.msk [vmem:[%s261 + $0x8] sm:$0xff] %vm303, %v637
          %644 = vst.msk [vmem:[%s261 + $0x10] sm:$0xff] %vm303, %v639
          %645 = vst.msk [vmem:[%s261 + $0x18] sm:$0xff] %vm303, %v641
        $region52: #{tpu_custom_call.1} parent=39 // pred_fallthru
          _
        %p646 = scmp.lt.s32.totalorder %s23, 1
        %s647 = scalar_select %p646, %s23, 1
        %s648 = smul.addr %s647, 4
        %s649 = smul.addr %s648, 8
        %s650 = scalar_lea.vmem %s5, %s649
        // Predicated region
        $region53: #{tpu_custom_call.1} parent=39 // pred_check
          %p651 = pneg %p161
        $region54: #{tpu_custom_call.1} parent=39 // pred_check_branch
          %653 = sbr.rel (%p651) target = $region56
        $region55: #{tpu_custom_call.1} parent=39 // pred_region
          _
        $region56: #{tpu_custom_call.1} parent=39 // pred_fallthru
          _
      $region40: #{tpu_custom_call.1} parent=5 // pred_fallthru
        _
      %p654 = scmp.le.s32.totalorder 2, %s14
      // Predicated region
      $region57: #{tpu_custom_call.1} parent=5 // pred_check
        %p655 = pneg %p654
      $region58: #{tpu_custom_call.1} parent=5 // pred_check_branch
        %657 = sbr.rel (%p655) target = $region60
      $region59: #{tpu_custom_call.1} parent=5 // pred_region
        %s658 = ssub.s32 %s14, 2
        // Predicated region
        $region61: #{tpu_custom_call.1} parent=59 // pred_check
          %p659 = pneg %p167
        $region62: #{tpu_custom_call.1} parent=59 // pred_check_branch
          %661 = sbr.rel (%p659) target = $region64
        $region63: #{tpu_custom_call.1} parent=59 // pred_region
          %p662 = scmp.lt.s32.totalorder %s25, 1
          %s663 = scalar_select %p662, %s25, 1
          %s664 = smul.addr %s663, 4
          %s665 = smul.addr %s664, 8
          %s666 = scalar_lea.vmem %s5, %s665
        $region64: #{tpu_custom_call.1} parent=59 // pred_fallthru
          _
      $region60: #{tpu_custom_call.1} parent=5 // pred_fallthru
        _
    $region6: #{tpu_custom_call.1} parent=1 // loop_footer
      %s18 = sadd.s32 1, %s14
    $region7: #{tpu_custom_call.1} parent=1 // loop_footer_branch
      %13 = sbr.rel target = $region3
    $region8: #{tpu_custom_call.1} parent=1 // loop_exit
      _
    %667 = vsyncpa [#allocation5], 1
    %s668 = scalar_lea.sflag [#allocation5], 1
    %669 = vsyncpa %s668, 1

</llo_original>
